<compile_context>
chip_gen: v7x
topology: tpu7x:2x2x1
jax: 0.10.0
libtpu: 0.0.40
codegen_flags: <defaults>
</compile_context>

<pallas_src>
import numpy as np
import jax
import jax.numpy as jnp
from jax.experimental import pallas as pl
from jax.experimental.pallas import tpu as pltpu

FPH_DIM = 4  # chunk size used by torch.split(x, FPH_DIM, dim=2) in the module


def _round_up(v, m):
    return ((v + m - 1) // m) * m


def _make_kernel(num_tail_layers, K, c_out):
    """Kernel over one row tile.

    Refs, in order: x (tm, D), y (tm, Dy), w1x_bd (D, K*C1), w1y_t (Dy, K*C1),
    b1_t (1, K*C1), then (w_bd, b_t) per remaining layer, then out (tm, c_out).
    """

    def kernel(x_ref, y_ref, w1x_ref, w1y_ref, b1_ref, *refs):
        o_ref = refs[-1]
        params = refs[:-1]

        # Layer 1: block-diagonal x-part (one lane-dense matmul covers all K
        # chunks) + shared y-part computed once (K-tiled via the weight).
        h = jnp.dot(x_ref[...], w1x_ref[...], preferred_element_type=jnp.float32)
        h = h + jnp.dot(y_ref[...], w1y_ref[...], preferred_element_type=jnp.float32)
        h = jnp.maximum(h + b1_ref[...], 0.0)                    # (tm, K*C1)

        # Remaining layers: single block-diagonal matmul each.
        for l in range(num_tail_layers):
            w = params[2 * l][...]
            b = params[2 * l + 1][...]
            h = jnp.dot(h.astype(w.dtype), w, preferred_element_type=jnp.float32)
            h = jnp.maximum(h + b, 0.0)                          # (tm, K*C_l)

        # Max over the K lane groups -> (tm, c_out), single store.
        acc = h[:, :c_out]
        for k in range(1, K):
            acc = jnp.maximum(acc, h[:, k * c_out:(k + 1) * c_out])
        o_ref[...] = acc.astype(o_ref.dtype)

    return kernel


def feature_transformation(x, y, weights, biases, *, tm=512,
                           compute_dtype=jnp.bfloat16):
    """x: (B, N, D), y: (B, N, Dy) -> (B, N, C_out_last).

    weights[l]: BN-folded 1x1 conv weight (C_{l-1}, C_l); biases[l]: (1, C_l).
    """
    B, N, D = x.shape
    Dy = y.shape[2]
    assert D % FPH_DIM == 0
    K = D // FPH_DIM
    M = B * N

    num_layers = len(weights)
    c1 = weights[0].shape[1]
    c_out = weights[-1].shape[1]

    # Row tile: big (grid-step overhead dominates; VMEM is nowhere near the
    # limit) but keep >= 2 row tiles whenever possible for v7x's 2 TensorCores.
    tm = min(tm, max(16, _round_up(pl.cdiv(M, 2), 16)))
    Mp = _round_up(M, tm)

    x2d = x.reshape(M, D)
    y2d = y.reshape(M, Dy)
    if Mp != M:
        # Zero-padded rows are harmless: the K-max is taken per row.
        x2d = jnp.pad(x2d, ((0, Mp - M), (0, 0)))
        y2d = jnp.pad(y2d, ((0, Mp - M), (0, 0)))
    x2d = x2d.astype(compute_dtype)
    y2d = y2d.astype(compute_dtype)

    # --- one-time host-side weight prep: fold K into the lane dimension ---
    w1 = weights[0]
    w1x = w1[:FPH_DIM]                    # applied to each x chunk
    w1y = w1[FPH_DIM:]                    # shared across K (y part)
    w1x_bd = jnp.zeros((D, K * c1), w1.dtype)
    for k in range(K):
        w1x_bd = w1x_bd.at[k * FPH_DIM:(k + 1) * FPH_DIM,
                           k * c1:(k + 1) * c1].set(w1x)
    w1y_t = jnp.tile(w1y, (1, K))
    b1_t = jnp.tile(biases[0], (1, K))

    param_args = [w1x_bd.astype(compute_dtype),
                  w1y_t.astype(compute_dtype),
                  b1_t.astype(jnp.float32)]
    in_specs = [
        pl.BlockSpec((tm, D), lambda i: (i, 0)),
        pl.BlockSpec((tm, Dy), lambda i: (i, 0)),
        pl.BlockSpec((D, K * c1), lambda i: (0, 0)),
        pl.BlockSpec((Dy, K * c1), lambda i: (0, 0)),
        pl.BlockSpec((1, K * c1), lambda i: (0, 0)),
    ]

    c_prev = c1
    for l in range(1, num_layers):
        w = weights[l]
        cl = w.shape[1]
        w_bd = jnp.zeros((K * c_prev, K * cl), w.dtype)
        for k in range(K):
            w_bd = w_bd.at[k * c_prev:(k + 1) * c_prev,
                           k * cl:(k + 1) * cl].set(w)
        b_t = jnp.tile(biases[l], (1, K))
        param_args += [w_bd.astype(compute_dtype), b_t.astype(jnp.float32)]
        in_specs += [pl.BlockSpec((K * c_prev, K * cl), lambda i: (0, 0)),
                     pl.BlockSpec((1, K * cl), lambda i: (0, 0))]
        c_prev = cl

    out = pl.pallas_call(
        _make_kernel(num_layers - 1, K, c_out),
        out_shape=jax.ShapeDtypeStruct((Mp, c_out), jnp.float32),
        grid_spec=pltpu.PrefetchScalarGridSpec(
            num_scalar_prefetch=0,
            grid=(Mp // tm,),
            in_specs=in_specs,
            out_specs=pl.BlockSpec((tm, c_out), lambda i: (i, 0)),
        ),
        compiler_params=pltpu.CompilerParams(
            dimension_semantics=("parallel",)),
    )(x2d, y2d, *param_args)

    return out[:M].reshape(B, N, c_out)


def init_params(key, in_channel, mlp):
    """Deterministic Conv2d(1x1)+BatchNorm2d params, BN folded into W and b."""
    weights, biases = [], []
    last = in_channel
    eps = 1e-5
    for out_c in mlp:
        key, k1, k2, k3, k4, k5 = jax.random.split(key, 6)
        w = 0.1 * jax.random.normal(k1, (last, out_c), jnp.float32)
        conv_b = 0.1 * jax.random.normal(k2, (out_c,), jnp.float32)
        gamma = 1.0 + 0.1 * jax.random.normal(k3, (out_c,), jnp.float32)
        beta = 0.1 * jax.random.normal(k4, (out_c,), jnp.float32)
        running_mean = 0.1 * jax.random.normal(k5, (out_c,), jnp.float32)
        running_var = jnp.ones((out_c,), jnp.float32)
        scale = gamma / jnp.sqrt(running_var + eps)
        shift = beta + (conv_b - running_mean) * scale
        weights.append(w * scale[None, :])      # BN scale folded into conv W
        biases.append(shift.reshape(1, -1))
        last = out_c
    return weights, biases


def reference(x, y, weights, biases):
    """Pure-JAX f32 reference of the same forward pass."""
    B, N, D = x.shape
    K = D // FPH_DIM
    x1 = x.reshape(B, N, K, FPH_DIM)
    y1 = jnp.broadcast_to(y[:, :, None, :], (B, N, K, y.shape[2]))
    h = jnp.concatenate([x1, y1], axis=-1)                      # (B, N, K, C_in)
    for w, b in zip(weights, biases):
        h = jnp.maximum(jnp.einsum("bnkc,cd->bnkd", h, w) + b, 0.0)
    return jnp.max(h, axis=2)                                   # (B, N, C_out)


if __name__ == "__main__":
    key = jax.random.PRNGKey(0)
    kx, ky, kp = jax.random.split(key, 3)

    B, N = 2, 600     # M = 1200 -> 3 row tiles of 512 (exercises padding)
    D = 16            # -> K = D // FPH_DIM = 4
    Dy = 4
    mlp = [32, 64]

    x = jax.random.normal(kx, (B, N, D), jnp.float32)
    y = jax.random.normal(ky, (B, N, Dy), jnp.float32)
    weights, biases = init_params(kp, FPH_DIM + Dy, mlp)

    out = feature_transformation(x, y, weights, biases, tm=512)
    out = jax.block_until_ready(out)

    ref = reference(x, y, weights, biases)
    assert out.shape == (B, N, mlp[-1])
    # bf16 feature/weight path with f32 accumulation -> loosened tolerance.
    np.testing.assert_allclose(np.asarray(out), np.asarray(ref),
                               rtol=4e-2, atol=4e-2)
    print("KERNEL_OK")
</pallas_src>

<mosaic_0001>
module attributes {stable_mosaic.version = 11 : i64} {
  func.func @kernel(%arg0: i32, %arg1: memref<512x16xbf16, #tpu.memory_space<vmem>>, %arg2: memref<512x4xbf16, #tpu.memory_space<vmem>>, %arg3: memref<16x128xbf16, #tpu.memory_space<vmem>>, %arg4: memref<4x128xbf16, #tpu.memory_space<vmem>>, %arg5: memref<1x128xf32, #tpu.memory_space<vmem>>, %arg6: memref<128x256xbf16, #tpu.memory_space<vmem>>, %arg7: memref<1x256xf32, #tpu.memory_space<vmem>>, %arg8: memref<512x64xf32, #tpu.memory_space<vmem>>) attributes {dimension_semantics = [#tpu.dimension_semantics<parallel>], iteration_bounds = array<i64: 3>, scalar_prefetch = 0 : i64, scratch_operands = 0 : i64, tpu.core_type = #tpu.core_type<tc>, window_params = [{transform_indices = @transform_0, window_bounds = array<i64: 512, 16>}, {transform_indices = @transform_1, window_bounds = array<i64: 512, 4>}, {pipeline_mode = #tpu.pipeline_mode<synchronous>, transform_indices = @transform_2, window_bounds = array<i64: 16, 128>}, {pipeline_mode = #tpu.pipeline_mode<synchronous>, transform_indices = @transform_3, window_bounds = array<i64: 4, 128>}, {pipeline_mode = #tpu.pipeline_mode<synchronous>, transform_indices = @transform_4, window_bounds = array<i64: 1, 128>}, {pipeline_mode = #tpu.pipeline_mode<synchronous>, transform_indices = @transform_5, window_bounds = array<i64: 128, 256>}, {pipeline_mode = #tpu.pipeline_mode<synchronous>, transform_indices = @transform_6, window_bounds = array<i64: 1, 256>}, {transform_indices = @transform_7, window_bounds = array<i64: 512, 64>}]} {
    %c0 = arith.constant 0 : index
    %c0_0 = arith.constant 0 : index
    %0 = vector.load %arg1[%c0, %c0_0] : memref<512x16xbf16, #tpu.memory_space<vmem>>, vector<512x16xbf16>
    %c0_1 = arith.constant 0 : index
    %c0_2 = arith.constant 0 : index
    %1 = vector.load %arg3[%c0_1, %c0_2] : memref<16x128xbf16, #tpu.memory_space<vmem>>, vector<16x128xbf16>
    %cst = arith.constant dense<0.000000e+00> : vector<512x128xf32>
    %2 = tpu.matmul %0, %1, %cst {dimension_numbers = #tpu.dot_dimension_numbers<[1], [0], [0], [1], [0, 0, 1, 1], [], []>} : vector<512x16xbf16>, vector<16x128xbf16>, vector<512x128xf32> -> vector<512x128xf32>
    %c0_3 = arith.constant 0 : index
    %c0_4 = arith.constant 0 : index
    %3 = vector.load %arg2[%c0_3, %c0_4] : memref<512x4xbf16, #tpu.memory_space<vmem>>, vector<512x4xbf16>
    %c0_5 = arith.constant 0 : index
    %c0_6 = arith.constant 0 : index
    %4 = vector.load %arg4[%c0_5, %c0_6] : memref<4x128xbf16, #tpu.memory_space<vmem>>, vector<4x128xbf16>
    %cst_7 = arith.constant dense<0.000000e+00> : vector<512x128xf32>
    %5 = tpu.matmul %3, %4, %cst_7 {dimension_numbers = #tpu.dot_dimension_numbers<[1], [0], [0], [1], [0, 0, 1, 1], [], []>} : vector<512x4xbf16>, vector<4x128xbf16>, vector<512x128xf32> -> vector<512x128xf32>
    %6 = arith.addf %2, %5 : vector<512x128xf32>
    %c0_8 = arith.constant 0 : index
    %c0_9 = arith.constant 0 : index
    %7 = vector.load %arg5[%c0_8, %c0_9] : memref<1x128xf32, #tpu.memory_space<vmem>>, vector<1x128xf32>
    %8 = vector.broadcast %7 : vector<1x128xf32> to vector<512x128xf32>
    %9 = arith.addf %6, %8 : vector<512x128xf32>
    %cst_10 = arith.constant 0.000000e+00 : f32
    %10 = vector.broadcast %cst_10 : f32 to vector<512x128xf32>
    %11 = arith.maximumf %9, %10 : vector<512x128xf32>
    %c0_11 = arith.constant 0 : index
    %c0_12 = arith.constant 0 : index
    %12 = vector.load %arg6[%c0_11, %c0_12] : memref<128x256xbf16, #tpu.memory_space<vmem>>, vector<128x256xbf16>
    %c0_13 = arith.constant 0 : index
    %c0_14 = arith.constant 0 : index
    %13 = vector.load %arg7[%c0_13, %c0_14] : memref<1x256xf32, #tpu.memory_space<vmem>>, vector<1x256xf32>
    %14 = arith.truncf %11 : vector<512x128xf32> to vector<512x128xbf16>
    %cst_15 = arith.constant dense<0.000000e+00> : vector<512x256xf32>
    %15 = tpu.matmul %14, %12, %cst_15 {dimension_numbers = #tpu.dot_dimension_numbers<[1], [0], [0], [1], [0, 0, 1, 1], [], []>} : vector<512x128xbf16>, vector<128x256xbf16>, vector<512x256xf32> -> vector<512x256xf32>
    %16 = vector.broadcast %13 : vector<1x256xf32> to vector<512x256xf32>
    %17 = arith.addf %15, %16 : vector<512x256xf32>
    %cst_16 = arith.constant 0.000000e+00 : f32
    %18 = vector.broadcast %cst_16 : f32 to vector<512x256xf32>
    %19 = arith.maximumf %17, %18 : vector<512x256xf32>
    %20 = vector.extract_strided_slice %19 {offsets = [0, 0], sizes = [512, 64], strides = [1, 1]} : vector<512x256xf32> to vector<512x64xf32>
    %21 = vector.extract_strided_slice %19 {offsets = [0, 64], sizes = [512, 64], strides = [1, 1]} : vector<512x256xf32> to vector<512x64xf32>
    %22 = arith.maximumf %20, %21 : vector<512x64xf32>
    %23 = vector.extract_strided_slice %19 {offsets = [0, 128], sizes = [512, 64], strides = [1, 1]} : vector<512x256xf32> to vector<512x64xf32>
    %24 = arith.maximumf %22, %23 : vector<512x64xf32>
    %25 = vector.extract_strided_slice %19 {offsets = [0, 192], sizes = [512, 64], strides = [1, 1]} : vector<512x256xf32> to vector<512x64xf32>
    %26 = arith.maximumf %24, %25 : vector<512x64xf32>
    %c0_17 = arith.constant 0 : index
    %c0_18 = arith.constant 0 : index
    %27 = vector.load %arg8[%c0_17, %c0_18] : memref<512x64xf32, #tpu.memory_space<vmem>>, vector<512x64xf32>
    tpu.vector_store %arg8[%c0_17, %c0_18], %26 {strides = array<i32>} : memref<512x64xf32, #tpu.memory_space<vmem>>, vector<512x64xf32>,
    return
  }
  func.func @transform_0(%arg0: i32) -> (i32, i32) {
    %c0_i32 = arith.constant 0 : i32
    %c0_i32_0 = arith.constant 0 : i32
    return %arg0, %c0_i32 : i32, i32
  }
  func.func @transform_1(%arg0: i32) -> (i32, i32) {
    %c0_i32 = arith.constant 0 : i32
    %c0_i32_0 = arith.constant 0 : i32
    return %arg0, %c0_i32 : i32, i32
  }
  func.func @transform_2(%arg0: i32) -> (i32, i32) {
    %c0_i32 = arith.constant 0 : i32
    %c0_i32_0 = arith.constant 0 : i32
    %c0_i32_1 = arith.constant 0 : i32
    return %c0_i32, %c0_i32_0 : i32, i32
  }
  func.func @transform_3(%arg0: i32) -> (i32, i32) {
    %c0_i32 = arith.constant 0 : i32
    %c0_i32_0 = arith.constant 0 : i32
    %c0_i32_1 = arith.constant 0 : i32
    return %c0_i32, %c0_i32_0 : i32, i32
  }
  func.func @transform_4(%arg0: i32) -> (i32, i32) {
    %c0_i32 = arith.constant 0 : i32
    %c0_i32_0 = arith.constant 0 : i32
    %c0_i32_1 = arith.constant 0 : i32
    return %c0_i32, %c0_i32_0 : i32, i32
  }
  func.func @transform_5(%arg0: i32) -> (i32, i32) {
    %c0_i32 = arith.constant 0 : i32
    %c0_i32_0 = arith.constant 0 : i32
    %c0_i32_1 = arith.constant 0 : i32
    return %c0_i32, %c0_i32_0 : i32, i32
  }
  func.func @transform_6(%arg0: i32) -> (i32, i32) {
    %c0_i32 = arith.constant 0 : i32
    %c0_i32_0 = arith.constant 0 : i32
    %c0_i32_1 = arith.constant 0 : i32
    return %c0_i32, %c0_i32_0 : i32, i32
  }
  func.func @transform_7(%arg0: i32) -> (i32, i32) {
    %c0_i32 = arith.constant 0 : i32
    %c0_i32_0 = arith.constant 0 : i32
    return %arg0, %c0_i32 : i32, i32
  }
}

</mosaic_0001>

<llo_original>
// kernel: tpu_custom_call.1
$region0: #{tpu_custom_call.1}
  #allocation0 [shape = 'u32[]', space=smem, size = 0x4, offset = 0x4, fixed_abs, tag = 'smem constant byte address 0x4 - core index']
  #allocation1 [shape = 'u32[144,128]{1,0:T(1,128)}', space=vmem, size = 0x12000, scoped, tag = 'internal scratch']
  %s0 = inlined_call_operand.vmem [shape: bf16[1536,16], index: 0, kind: input, shape index: {}]
  %s1 = inlined_call_operand.vmem [shape: bf16[1536,4], index: 1, kind: input, shape index: {}]
  %s2 = inlined_call_operand.vmem [shape: bf16[16,128], index: 2, kind: input, shape index: {}]
  %s3 = inlined_call_operand.vmem [shape: bf16[4,128], index: 3, kind: input, shape index: {}]
  %s4 = inlined_call_operand.vmem [shape: f32[1,128], index: 4, kind: input, shape index: {}]
  %s5 = inlined_call_operand.vmem [shape: bf16[128,256], index: 5, kind: input, shape index: {}]
  %s6 = inlined_call_operand.vmem [shape: f32[1,256], index: 6, kind: input, shape index: {}]
  %s7 = inlined_call_operand.vmem [shape: f32[1536,64], index: 7, kind: output, shape index: {}]
  %s8 = sld [smem:[#allocation0]]
  $region61: #{tpu_custom_call.1} parent=0
    _
  %s10 = ssub.s32 1, %s8
  %s11 = scalar_select 0, %s10, %s8
  loop: start=0, step=1, limit=5
  $region2: #{tpu_custom_call.1} parent=0 // loop_pre_header
    _
  $region3: #{tpu_custom_call.1} parent=0 // loop_header
    %s13 = sphi 0, %s17
    %p14 = scmp.ge.s32.totalorder %s13, 5
    %s23 = sphi 0, %s25
    %s26 = sphi 0, %s23
    %s27 = sphi 0, %s26
    %s43 = sphi 0, %s27
    %s49 = sphi 0, %s51
    %s52 = sphi 0, %s49
    %s53 = sphi 0, %s52
    %s69 = sphi 0, %s53
    %s73 = sphi 0, %s73
    %s75 = sphi 0, %s73
    %s76 = sphi 0, %s75
    %s90 = sphi 0, %s76
    %s94 = sphi 0, %s94
    %s96 = sphi 0, %s94
    %s97 = sphi 0, %s96
    %s111 = sphi 0, %s97
    %s115 = sphi 0, %s115
    %s117 = sphi 0, %s115
    %s118 = sphi 0, %s117
    %s132 = sphi 0, %s118
    %s136 = sphi 0, %s136
    %s138 = sphi 0, %s136
    %s139 = sphi 0, %s138
    %s153 = sphi 0, %s139
    %s157 = sphi 0, %s157
    %s159 = sphi 0, %s157
    %s160 = sphi 0, %s159
    %s174 = sphi 0, %s160
    %s180 = sphi 0, %s182
    %s183 = sphi 0, %s180
    %s184 = sphi 0, %s183
    %s200 = sphi 0, %s184
  $region4: #{tpu_custom_call.1} parent=0 // loop_header_branch
    %16 = sbr.rel (%p14) target = $region8
  $region5: #{tpu_custom_call.1} parent=0 // loop_body
    %s18 = ssub.s32 %s13, 1
    %s19 = ssub.s32 %s13, 2
    %s20 = sadd.s32 %s13, 1
    %s21 = ssub.s32 %s13, %s20
    %p22 = scmp.eq.s32.totalorder %s21, 0
    %s24 = sadd.s32 %s23, 1
    %s25 = scalar_select %p22, %s23, %s24
    %p28 = pneg %p22
    %p29 = scmp.eq.s32.totalorder %s13, 2
    %p30 = por %p28, %p29
    %p31 = scmp.ne.s32.totalorder %s23, %s26
    %p32 = scmp.eq.s32.totalorder %s13, 0
    %p33 = por %p31, %p32
    %p34 = scmp.ne.s32.totalorder %s23, %s26
    %p35 = scmp.eq.s32.totalorder %s18, 2
    %p36 = por %p34, %p35
    %p37 = scmp.ne.s32.totalorder %s26, %s27
    %p38 = scmp.eq.s32.totalorder %s18, 0
    %p39 = por %p37, %p38
    %p40 = scmp.ne.s32.totalorder %s26, %s27
    %p41 = scmp.eq.s32.totalorder %s19, 2
    %p42 = por %p40, %p41
    %p44 = scmp.ne.s32.totalorder %s27, %s43
    %p45 = scmp.eq.s32.totalorder %s19, 0
    %p46 = por %p44, %p45
    %s47 = ssub.s32 %s13, %s20
    %p48 = scmp.eq.s32.totalorder %s47, 0
    %s50 = sadd.s32 %s49, 1
    %s51 = scalar_select %p48, %s49, %s50
    %p54 = pneg %p48
    %p55 = scmp.eq.s32.totalorder %s13, 2
    %p56 = por %p54, %p55
    %p57 = scmp.ne.s32.totalorder %s49, %s52
    %p58 = scmp.eq.s32.totalorder %s13, 0
    %p59 = por %p57, %p58
    %p60 = scmp.ne.s32.totalorder %s49, %s52
    %p61 = scmp.eq.s32.totalorder %s18, 2
    %p62 = por %p60, %p61
    %p63 = scmp.ne.s32.totalorder %s52, %s53
    %p64 = scmp.eq.s32.totalorder %s18, 0
    %p65 = por %p63, %p64
    %p66 = scmp.ne.s32.totalorder %s52, %s53
    %p67 = scmp.eq.s32.totalorder %s19, 2
    %p68 = por %p66, %p67
    %p70 = scmp.ne.s32.totalorder %s53, %s69
    %p71 = scmp.eq.s32.totalorder %s19, 0
    %p72 = por %p70, %p71
    %s74 = sadd.s32 %s73, 1
    %p77 = scmp.eq.s32.totalorder %s13, 2
    %p78 = scmp.ne.s32.totalorder %s73, %s75
    %p79 = scmp.eq.s32.totalorder %s13, 0
    %p80 = por %p78, %p79
    %p81 = scmp.ne.s32.totalorder %s73, %s75
    %p82 = scmp.eq.s32.totalorder %s18, 2
    %p83 = por %p81, %p82
    %p84 = scmp.ne.s32.totalorder %s75, %s76
    %p85 = scmp.eq.s32.totalorder %s18, 0
    %p86 = por %p84, %p85
    %p87 = scmp.ne.s32.totalorder %s75, %s76
    %p88 = scmp.eq.s32.totalorder %s19, 2
    %p89 = por %p87, %p88
    %p91 = scmp.ne.s32.totalorder %s76, %s90
    %p92 = scmp.eq.s32.totalorder %s19, 0
    %p93 = por %p91, %p92
    %s95 = sadd.s32 %s94, 1
    %p98 = scmp.eq.s32.totalorder %s13, 2
    %p99 = scmp.ne.s32.totalorder %s94, %s96
    %p100 = scmp.eq.s32.totalorder %s13, 0
    %p101 = por %p99, %p100
    %p102 = scmp.ne.s32.totalorder %s94, %s96
    %p103 = scmp.eq.s32.totalorder %s18, 2
    %p104 = por %p102, %p103
    %p105 = scmp.ne.s32.totalorder %s96, %s97
    %p106 = scmp.eq.s32.totalorder %s18, 0
    %p107 = por %p105, %p106
    %p108 = scmp.ne.s32.totalorder %s96, %s97
    %p109 = scmp.eq.s32.totalorder %s19, 2
    %p110 = por %p108, %p109
    %p112 = scmp.ne.s32.totalorder %s97, %s111
    %p113 = scmp.eq.s32.totalorder %s19, 0
    %p114 = por %p112, %p113
    %s116 = sadd.s32 %s115, 1
    %p119 = scmp.eq.s32.totalorder %s13, 2
    %p120 = scmp.ne.s32.totalorder %s115, %s117
    %p121 = scmp.eq.s32.totalorder %s13, 0
    %p122 = por %p120, %p121
    %p123 = scmp.ne.s32.totalorder %s115, %s117
    %p124 = scmp.eq.s32.totalorder %s18, 2
    %p125 = por %p123, %p124
    %p126 = scmp.ne.s32.totalorder %s117, %s118
    %p127 = scmp.eq.s32.totalorder %s18, 0
    %p128 = por %p126, %p127
    %p129 = scmp.ne.s32.totalorder %s117, %s118
    %p130 = scmp.eq.s32.totalorder %s19, 2
    %p131 = por %p129, %p130
    %p133 = scmp.ne.s32.totalorder %s118, %s132
    %p134 = scmp.eq.s32.totalorder %s19, 0
    %p135 = por %p133, %p134
    %s137 = sadd.s32 %s136, 1
    %p140 = scmp.eq.s32.totalorder %s13, 2
    %p141 = scmp.ne.s32.totalorder %s136, %s138
    %p142 = scmp.eq.s32.totalorder %s13, 0
    %p143 = por %p141, %p142
    %p144 = scmp.ne.s32.totalorder %s136, %s138
    %p145 = scmp.eq.s32.totalorder %s18, 2
    %p146 = por %p144, %p145
    %p147 = scmp.ne.s32.totalorder %s138, %s139
    %p148 = scmp.eq.s32.totalorder %s18, 0
    %p149 = por %p147, %p148
    %p150 = scmp.ne.s32.totalorder %s138, %s139
    %p151 = scmp.eq.s32.totalorder %s19, 2
    %p152 = por %p150, %p151
    %p154 = scmp.ne.s32.totalorder %s139, %s153
    %p155 = scmp.eq.s32.totalorder %s19, 0
    %p156 = por %p154, %p155
    %s158 = sadd.s32 %s157, 1
    %p161 = scmp.eq.s32.totalorder %s13, 2
    %p162 = scmp.ne.s32.totalorder %s157, %s159
    %p163 = scmp.eq.s32.totalorder %s13, 0
    %p164 = por %p162, %p163
    %p165 = scmp.ne.s32.totalorder %s157, %s159
    %p166 = scmp.eq.s32.totalorder %s18, 2
    %p167 = por %p165, %p166
    %p168 = scmp.ne.s32.totalorder %s159, %s160
    %p169 = scmp.eq.s32.totalorder %s18, 0
    %p170 = por %p168, %p169
    %p171 = scmp.ne.s32.totalorder %s159, %s160
    %p172 = scmp.eq.s32.totalorder %s19, 2
    %p173 = por %p171, %p172
    %p175 = scmp.ne.s32.totalorder %s160, %s174
    %p176 = scmp.eq.s32.totalorder %s19, 0
    %p177 = por %p175, %p176
    %s178 = ssub.s32 %s13, %s20
    %p179 = scmp.eq.s32.totalorder %s178, 0
    %s181 = sadd.s32 %s180, 1
    %s182 = scalar_select %p179, %s180, %s181
    %p185 = pneg %p179
    %p186 = scmp.eq.s32.totalorder %s13, 2
    %p187 = por %p185, %p186
    %p188 = scmp.ne.s32.totalorder %s180, %s183
    %p189 = scmp.eq.s32.totalorder %s13, 0
    %p190 = por %p188, %p189
    %p191 = scmp.ne.s32.totalorder %s180, %s183
    %p192 = scmp.eq.s32.totalorder %s18, 2
    %p193 = por %p191, %p192
    %p194 = scmp.ne.s32.totalorder %s183, %s184
    %p195 = scmp.eq.s32.totalorder %s18, 0
    %p196 = por %p194, %p195
    %p197 = scmp.ne.s32.totalorder %s183, %s184
    %p198 = scmp.eq.s32.totalorder %s19, 2
    %p199 = por %p197, %p198
    %p201 = scmp.ne.s32.totalorder %s184, %s200
    %p202 = scmp.eq.s32.totalorder %s19, 0
    %p203 = por %p201, %p202
    %p204 = scmp.le.s32.totalorder 1, %s13
    %p205 = scmp.lt.s32.totalorder %s13, 4
    %p206 = pnand %p204, %p205
    %p207 = pneg %p206
    // Predicated region
    $region9: #{tpu_custom_call.1} parent=5 // pred_check
      _
    $region10: #{tpu_custom_call.1} parent=5 // pred_check_branch
      %209 = sbr.rel (%p206) target = $region12
    $region11: #{tpu_custom_call.1} parent=5 // pred_region
      %s210 = ssub.s32 %s13, 1
      // Predicated region
      $region13: #{tpu_custom_call.1} parent=11 // pred_check
        %p211 = pneg %p86
      $region14: #{tpu_custom_call.1} parent=11 // pred_check_branch
        %213 = sbr.rel (%p211) target = $region16
      $region15: #{tpu_custom_call.1} parent=11 // pred_region
        _
      $region16: #{tpu_custom_call.1} parent=11 // pred_fallthru
        _
      // Predicated region
      $region17: #{tpu_custom_call.1} parent=11 // pred_check
        %p214 = pneg %p107
      $region18: #{tpu_custom_call.1} parent=11 // pred_check_branch
        %216 = sbr.rel (%p214) target = $region20
      $region19: #{tpu_custom_call.1} parent=11 // pred_region
        _
      $region20: #{tpu_custom_call.1} parent=11 // pred_fallthru
        _
      // Predicated region
      $region21: #{tpu_custom_call.1} parent=11 // pred_check
        %p217 = pneg %p128
      $region22: #{tpu_custom_call.1} parent=11 // pred_check_branch
        %219 = sbr.rel (%p217) target = $region24
      $region23: #{tpu_custom_call.1} parent=11 // pred_region
        _
      $region24: #{tpu_custom_call.1} parent=11 // pred_fallthru
        _
      // Predicated region
      $region25: #{tpu_custom_call.1} parent=11 // pred_check
        %p220 = pneg %p149
      $region26: #{tpu_custom_call.1} parent=11 // pred_check_branch
        %222 = sbr.rel (%p220) target = $region28
      $region27: #{tpu_custom_call.1} parent=11 // pred_region
        _
      $region28: #{tpu_custom_call.1} parent=11 // pred_fallthru
        _
      // Predicated region
      $region29: #{tpu_custom_call.1} parent=11 // pred_check
        %p223 = pneg %p170
      $region30: #{tpu_custom_call.1} parent=11 // pred_check_branch
        %225 = sbr.rel (%p223) target = $region32
      $region31: #{tpu_custom_call.1} parent=11 // pred_region
        _
      $region32: #{tpu_custom_call.1} parent=11 // pred_fallthru
        _
    $region12: #{tpu_custom_call.1} parent=5 // pred_fallthru
      _
    %p226 = scmp.lt.s32.totalorder %s13, 3
    // Predicated region
    $region33: #{tpu_custom_call.1} parent=5 // pred_check
      %p227 = pneg %p226
    $region34: #{tpu_custom_call.1} parent=5 // pred_check_branch
      %229 = sbr.rel (%p227) target = $region36
    $region35: #{tpu_custom_call.1} parent=5 // pred_region
      // Predicated region
      $region37: #{tpu_custom_call.1} parent=35 // pred_check
        %p230 = pneg %p33
      $region38: #{tpu_custom_call.1} parent=35 // pred_check_branch
        %232 = sbr.rel (%p230) target = $region40
      $region39: #{tpu_custom_call.1} parent=35 // pred_region
        %s233 = smul.u32 64, %s13
        %p234 = scmp.lt.s32.totalorder %s233, 191
        %s235 = scalar_select %p234, %s233, 191
        %s236 = smul.addr %s235, 4
        %s237 = scalar_lea.vmem %s0, %s236
        %s238 = smul.u32 64, %s13
      $region40: #{tpu_custom_call.1} parent=35 // pred_fallthru
        _
      // Predicated region
      $region41: #{tpu_custom_call.1} parent=35 // pred_check
        %p239 = pneg %p59
      $region42: #{tpu_custom_call.1} parent=35 // pred_check_branch
        %241 = sbr.rel (%p239) target = $region44
      $region43: #{tpu_custom_call.1} parent=35 // pred_region
        %s242 = smul.u32 64, %s13
        %p243 = scmp.lt.s32.totalorder %s242, 191
        %s244 = scalar_select %p243, %s242, 191
        %s245 = smul.addr %s244, 4
        %s246 = scalar_lea.vmem %s1, %s245
        %s247 = smul.u32 64, %s13
      $region44: #{tpu_custom_call.1} parent=35 // pred_fallthru
        _
    $region36: #{tpu_custom_call.1} parent=5 // pred_fallthru
      _
    %p248 = scmp.le.s32.totalorder 1, %s13
    %p249 = scmp.lt.s32.totalorder %s13, 4
    %p250 = pnand %p248, %p249
    %p251 = pneg %p250
    // Predicated region
    $region45: #{tpu_custom_call.1} parent=5 // pred_check
      _
    $region46: #{tpu_custom_call.1} parent=5 // pred_check_branch
      %253 = sbr.rel (%p250) target = $region48
    $region47: #{tpu_custom_call.1} parent=5 // pred_region
      %s254 = ssub.s32 %s13, 1
      %s255 = smul.u32 64, %s18
      %p256 = scmp.lt.s32.totalorder %s255, 191
      %s257 = scalar_select %p256, %s255, 191
      %s258 = smul.addr %s257, 4
      %s259 = scalar_lea.vmem %s0, %s258
      %p260 = pneg %p39
      %p261 = pneg %p36
      %s262 = smul.u32 64, %s18
      %p263 = scmp.lt.s32.totalorder %s262, 191
      %s264 = scalar_select %p263, %s262, 191
      %s265 = smul.addr %s264, 4
      %s266 = scalar_lea.vmem %s1, %s265
      %p267 = pneg %p65
      %p268 = pneg %p62
      %p269 = pneg %p86
      %p270 = pneg %p83
      %p271 = pneg %p107
      %p272 = pneg %p104
      %p273 = pneg %p128
      %p274 = pneg %p125
      %p275 = pneg %p149
      %p276 = pneg %p146
      %p277 = pneg %p170
      %p278 = pneg %p167
      %p279 = pneg %p196
      %p280 = pneg %p193
      %s281 = smul.u32 64, %s18
      %p282 = scmp.lt.s32.totalorder %s281, 191
      %s283 = scalar_select %p282, %s281, 191
      %s284 = smul.addr %s283, 8
      %s285 = scalar_lea.vmem %s7, %s284
      %s286 = smul.u32 64, %s18
      %p287 = scmp.lt.s32.totalorder %s286, 191
      %s288 = scalar_select %p287, %s286, 191
      %s289 = smul.addr %s288, 4
      %s290 = scalar_lea.vmem %s0, %s289
      %s291 = smul.u32 64, %s18
      %s292 = smul.u32 64, %s18
      %p293 = scmp.lt.s32.totalorder %s292, 191
      %s294 = scalar_select %p293, %s292, 191
      %s295 = smul.addr %s294, 4
      %s296 = scalar_lea.vmem %s1, %s295
      %s297 = smul.u32 64, %s18
      %s298 = smul.u32 64, %s18
      %p299 = scmp.lt.s32.totalorder %s298, 191
      %s300 = scalar_select %p299, %s298, 191
      %s301 = smul.addr %s300, 8
      %s302 = scalar_lea.vmem %s7, %s301
      %s303 = smul.u32 64, %s18
      %v305 = vld [vmem:[%s290] sm:$0xf]
      %v306 = vld [vmem:[%s290 + $0x4] sm:$0xf]
      %v307 = vld [vmem:[%s290 + $0x8] sm:$0xf]
      %v308 = vld [vmem:[%s290 + $0xc] sm:$0xf]
      %v309 = vld [vmem:[%s290 + $0x10] sm:$0xf]
      %v310 = vld [vmem:[%s290 + $0x14] sm:$0xf]
      %v311 = vld [vmem:[%s290 + $0x18] sm:$0xf]
      %v312 = vld [vmem:[%s290 + $0x1c] sm:$0xf]
      %v313 = vld [vmem:[%s290 + $0x20] sm:$0xf]
      %v314 = vld [vmem:[%s290 + $0x24] sm:$0xf]
      %v315 = vld [vmem:[%s290 + $0x28] sm:$0xf]
      %v316 = vld [vmem:[%s290 + $0x2c] sm:$0xf]
      %v317 = vld [vmem:[%s290 + $0x30] sm:$0xf]
      %v318 = vld [vmem:[%s290 + $0x34] sm:$0xf]
      %v319 = vld [vmem:[%s290 + $0x38] sm:$0xf]
      %v320 = vld [vmem:[%s290 + $0x3c] sm:$0xf]
      %v321 = vld [vmem:[%s290 + $0x40] sm:$0xf]
      %v322 = vld [vmem:[%s290 + $0x44] sm:$0xf]
      %v323 = vld [vmem:[%s290 + $0x48] sm:$0xf]
      %v324 = vld [vmem:[%s290 + $0x4c] sm:$0xf]
      %v325 = vld [vmem:[%s290 + $0x50] sm:$0xf]
      %v326 = vld [vmem:[%s290 + $0x54] sm:$0xf]
      %v327 = vld [vmem:[%s290 + $0x58] sm:$0xf]
      %v328 = vld [vmem:[%s290 + $0x5c] sm:$0xf]
      %v329 = vld [vmem:[%s290 + $0x60] sm:$0xf]
      %v330 = vld [vmem:[%s290 + $0x64] sm:$0xf]
      %v331 = vld [vmem:[%s290 + $0x68] sm:$0xf]
      %v332 = vld [vmem:[%s290 + $0x6c] sm:$0xf]
      %v333 = vld [vmem:[%s290 + $0x70] sm:$0xf]
      %v334 = vld [vmem:[%s290 + $0x74] sm:$0xf]
      %v335 = vld [vmem:[%s290 + $0x78] sm:$0xf]
      %v336 = vld [vmem:[%s290 + $0x7c] sm:$0xf]
      %v337 = vld [vmem:[%s290 + $0x80] sm:$0xf]
      %v338 = vld [vmem:[%s290 + $0x84] sm:$0xf]
      %v339 = vld [vmem:[%s290 + $0x88] sm:$0xf]
      %v340 = vld [vmem:[%s290 + $0x8c] sm:$0xf]
      %v341 = vld [vmem:[%s290 + $0x90] sm:$0xf]
      %v342 = vld [vmem:[%s290 + $0x94] sm:$0xf]
      %v343 = vld [vmem:[%s290 + $0x98] sm:$0xf]
      %v344 = vld [vmem:[%s290 + $0x9c] sm:$0xf]
      %v345 = vld [vmem:[%s290 + $0xa0] sm:$0xf]
      %v346 = vld [vmem:[%s290 + $0xa4] sm:$0xf]
      %v347 = vld [vmem:[%s290 + $0xa8] sm:$0xf]
      %v348 = vld [vmem:[%s290 + $0xac] sm:$0xf]
      %v349 = vld [vmem:[%s290 + $0xb0] sm:$0xf]
      %v350 = vld [vmem:[%s290 + $0xb4] sm:$0xf]
      %v351 = vld [vmem:[%s290 + $0xb8] sm:$0xf]
      %v352 = vld [vmem:[%s290 + $0xbc] sm:$0xf]
      %v353 = vld [vmem:[%s290 + $0xc0] sm:$0xf]
      %v354 = vld [vmem:[%s290 + $0xc4] sm:$0xf]
      %v355 = vld [vmem:[%s290 + $0xc8] sm:$0xf]
      %v356 = vld [vmem:[%s290 + $0xcc] sm:$0xf]
      %v357 = vld [vmem:[%s290 + $0xd0] sm:$0xf]
      %v358 = vld [vmem:[%s290 + $0xd4] sm:$0xf]
      %v359 = vld [vmem:[%s290 + $0xd8] sm:$0xf]
      %v360 = vld [vmem:[%s290 + $0xdc] sm:$0xf]
      %v361 = vld [vmem:[%s290 + $0xe0] sm:$0xf]
      %v362 = vld [vmem:[%s290 + $0xe4] sm:$0xf]
      %v363 = vld [vmem:[%s290 + $0xe8] sm:$0xf]
      %v364 = vld [vmem:[%s290 + $0xec] sm:$0xf]
      %v365 = vld [vmem:[%s290 + $0xf0] sm:$0xf]
      %v366 = vld [vmem:[%s290 + $0xf4] sm:$0xf]
      %v367 = vld [vmem:[%s290 + $0xf8] sm:$0xf]
      %v368 = vld [vmem:[%s290 + $0xfc] sm:$0xf]
      %v369 = vld [vmem:[%s2] sm:$0xf]
      %v370 = vld [vmem:[%s2 + $0x4] sm:$0xf]
      %v371 = vld [vmem:[%s296] sm:$0xf]
      %v372 = vld [vmem:[%s296 + $0x4] sm:$0xf]
      %v373 = vld [vmem:[%s296 + $0x8] sm:$0xf]
      %v374 = vld [vmem:[%s296 + $0xc] sm:$0xf]
      %v375 = vld [vmem:[%s296 + $0x10] sm:$0xf]
      %v376 = vld [vmem:[%s296 + $0x14] sm:$0xf]
      %v377 = vld [vmem:[%s296 + $0x18] sm:$0xf]
      %v378 = vld [vmem:[%s296 + $0x1c] sm:$0xf]
      %v379 = vld [vmem:[%s296 + $0x20] sm:$0xf]
      %v380 = vld [vmem:[%s296 + $0x24] sm:$0xf]
      %v381 = vld [vmem:[%s296 + $0x28] sm:$0xf]
      %v382 = vld [vmem:[%s296 + $0x2c] sm:$0xf]
      %v383 = vld [vmem:[%s296 + $0x30] sm:$0xf]
      %v384 = vld [vmem:[%s296 + $0x34] sm:$0xf]
      %v385 = vld [vmem:[%s296 + $0x38] sm:$0xf]
      %v386 = vld [vmem:[%s296 + $0x3c] sm:$0xf]
      %v387 = vld [vmem:[%s296 + $0x40] sm:$0xf]
      %v388 = vld [vmem:[%s296 + $0x44] sm:$0xf]
      %v389 = vld [vmem:[%s296 + $0x48] sm:$0xf]
      %v390 = vld [vmem:[%s296 + $0x4c] sm:$0xf]
      %v391 = vld [vmem:[%s296 + $0x50] sm:$0xf]
      %v392 = vld [vmem:[%s296 + $0x54] sm:$0xf]
      %v393 = vld [vmem:[%s296 + $0x58] sm:$0xf]
      %v394 = vld [vmem:[%s296 + $0x5c] sm:$0xf]
      %v395 = vld [vmem:[%s296 + $0x60] sm:$0xf]
      %v396 = vld [vmem:[%s296 + $0x64] sm:$0xf]
      %v397 = vld [vmem:[%s296 + $0x68] sm:$0xf]
      %v398 = vld [vmem:[%s296 + $0x6c] sm:$0xf]
      %v399 = vld [vmem:[%s296 + $0x70] sm:$0xf]
      %v400 = vld [vmem:[%s296 + $0x74] sm:$0xf]
      %v401 = vld [vmem:[%s296 + $0x78] sm:$0xf]
      %v402 = vld [vmem:[%s296 + $0x7c] sm:$0xf]
      %v403 = vld [vmem:[%s296 + $0x80] sm:$0xf]
      %v404 = vld [vmem:[%s296 + $0x84] sm:$0xf]
      %v405 = vld [vmem:[%s296 + $0x88] sm:$0xf]
      %v406 = vld [vmem:[%s296 + $0x8c] sm:$0xf]
      %v407 = vld [vmem:[%s296 + $0x90] sm:$0xf]
      %v408 = vld [vmem:[%s296 + $0x94] sm:$0xf]
      %v409 = vld [vmem:[%s296 + $0x98] sm:$0xf]
      %v410 = vld [vmem:[%s296 + $0x9c] sm:$0xf]
      %v411 = vld [vmem:[%s296 + $0xa0] sm:$0xf]
      %v412 = vld [vmem:[%s296 + $0xa4] sm:$0xf]
      %v413 = vld [vmem:[%s296 + $0xa8] sm:$0xf]
      %v414 = vld [vmem:[%s296 + $0xac] sm:$0xf]
      %v415 = vld [vmem:[%s296 + $0xb0] sm:$0xf]
      %v416 = vld [vmem:[%s296 + $0xb4] sm:$0xf]
      %v417 = vld [vmem:[%s296 + $0xb8] sm:$0xf]
      %v418 = vld [vmem:[%s296 + $0xbc] sm:$0xf]
      %v419 = vld [vmem:[%s296 + $0xc0] sm:$0xf]
      %v420 = vld [vmem:[%s296 + $0xc4] sm:$0xf]
      %v421 = vld [vmem:[%s296 + $0xc8] sm:$0xf]
      %v422 = vld [vmem:[%s296 + $0xcc] sm:$0xf]
      %v423 = vld [vmem:[%s296 + $0xd0] sm:$0xf]
      %v424 = vld [vmem:[%s296 + $0xd4] sm:$0xf]
      %v425 = vld [vmem:[%s296 + $0xd8] sm:$0xf]
      %v426 = vld [vmem:[%s296 + $0xdc] sm:$0xf]
      %v427 = vld [vmem:[%s296 + $0xe0] sm:$0xf]
      %v428 = vld [vmem:[%s296 + $0xe4] sm:$0xf]
      %v429 = vld [vmem:[%s296 + $0xe8] sm:$0xf]
      %v430 = vld [vmem:[%s296 + $0xec] sm:$0xf]
      %v431 = vld [vmem:[%s296 + $0xf0] sm:$0xf]
      %v432 = vld [vmem:[%s296 + $0xf4] sm:$0xf]
      %v433 = vld [vmem:[%s296 + $0xf8] sm:$0xf]
      %v434 = vld [vmem:[%s296 + $0xfc] sm:$0xf]
      %v435 = vld [vmem:[%s3] sm:$0x3]
      %v500 = vunpack.c.l.b16 %v371
      %v501 = vunpack.c.l.b16 %v372
      %v502 = vunpack.c.l.b16 %v373
      %v503 = vunpack.c.l.b16 %v374
      %v504 = vunpack.c.l.b16 %v375
      %v505 = vunpack.c.l.b16 %v376
      %v506 = vunpack.c.l.b16 %v377
      %v507 = vunpack.c.l.b16 %v378
      %v508 = vunpack.c.l.b16 %v379
      %v509 = vunpack.c.l.b16 %v380
      %v510 = vunpack.c.l.b16 %v381
      %v511 = vunpack.c.l.b16 %v382
      %v512 = vunpack.c.l.b16 %v383
      %v513 = vunpack.c.l.b16 %v384
      %v514 = vunpack.c.l.b16 %v385
      %v515 = vunpack.c.l.b16 %v386
      %v516 = vunpack.c.l.b16 %v387
      %v517 = vunpack.c.l.b16 %v388
      %v518 = vunpack.c.l.b16 %v389
      %v519 = vunpack.c.l.b16 %v390
      %v520 = vunpack.c.l.b16 %v391
      %v521 = vunpack.c.l.b16 %v392
      %v522 = vunpack.c.l.b16 %v393
      %v523 = vunpack.c.l.b16 %v394
      %v524 = vunpack.c.l.b16 %v395
      %v525 = vunpack.c.l.b16 %v396
      %v526 = vunpack.c.l.b16 %v397
      %v527 = vunpack.c.l.b16 %v398
      %v528 = vunpack.c.l.b16 %v399
      %v529 = vunpack.c.l.b16 %v400
      %v530 = vunpack.c.l.b16 %v401
      %v531 = vunpack.c.l.b16 %v402
      %v532 = vunpack.c.l.b16 %v403
      %v533 = vunpack.c.l.b16 %v404
      %v534 = vunpack.c.l.b16 %v405
      %v535 = vunpack.c.l.b16 %v406
      %v536 = vunpack.c.l.b16 %v407
      %v537 = vunpack.c.l.b16 %v408
      %v538 = vunpack.c.l.b16 %v409
      %v539 = vunpack.c.l.b16 %v410
      %v540 = vunpack.c.l.b16 %v411
      %v541 = vunpack.c.l.b16 %v412
      %v542 = vunpack.c.l.b16 %v413
      %v543 = vunpack.c.l.b16 %v414
      %v544 = vunpack.c.l.b16 %v415
      %v545 = vunpack.c.l.b16 %v416
      %v546 = vunpack.c.l.b16 %v417
      %v547 = vunpack.c.l.b16 %v418
      %v548 = vunpack.c.l.b16 %v419
      %v549 = vunpack.c.l.b16 %v420
      %v550 = vunpack.c.l.b16 %v421
      %v551 = vunpack.c.l.b16 %v422
      %v552 = vunpack.c.l.b16 %v423
      %v553 = vunpack.c.l.b16 %v424
      %v554 = vunpack.c.l.b16 %v425
      %v555 = vunpack.c.l.b16 %v426
      %v556 = vunpack.c.l.b16 %v427
      %v557 = vunpack.c.l.b16 %v428
      %v558 = vunpack.c.l.b16 %v429
      %v559 = vunpack.c.l.b16 %v430
      %v560 = vunpack.c.l.b16 %v431
      %v561 = vunpack.c.l.b16 %v432
      %v562 = vunpack.c.l.b16 %v433
      %v563 = vunpack.c.l.b16 %v434
      %v564 = vpack.c.b16 %v501, %v500
      %v565 = vpack.c.b16 %v503, %v502
      %v566 = vpack.c.b16 %v505, %v504
      %v567 = vpack.c.b16 %v507, %v506
      %v568 = vpack.c.b16 %v509, %v508
      %v569 = vpack.c.b16 %v511, %v510
      %v570 = vpack.c.b16 %v513, %v512
      %v571 = vpack.c.b16 %v515, %v514
      %v572 = vpack.c.b16 %v517, %v516
      %v573 = vpack.c.b16 %v519, %v518
      %v574 = vpack.c.b16 %v521, %v520
      %v575 = vpack.c.b16 %v523, %v522
      %v576 = vpack.c.b16 %v525, %v524
      %v577 = vpack.c.b16 %v527, %v526
      %v578 = vpack.c.b16 %v529, %v528
      %v579 = vpack.c.b16 %v531, %v530
      %v580 = vpack.c.b16 %v533, %v532
      %v581 = vpack.c.b16 %v535, %v534
      %v582 = vpack.c.b16 %v537, %v536
      %v583 = vpack.c.b16 %v539, %v538
      %v584 = vpack.c.b16 %v541, %v540
      %v585 = vpack.c.b16 %v543, %v542
      %v586 = vpack.c.b16 %v545, %v544
      %v587 = vpack.c.b16 %v547, %v546
      %v588 = vpack.c.b16 %v549, %v548
      %v589 = vpack.c.b16 %v551, %v550
      %v590 = vpack.c.b16 %v553, %v552
      %v591 = vpack.c.b16 %v555, %v554
      %v592 = vpack.c.b16 %v557, %v556
      %v593 = vpack.c.b16 %v559, %v558
      %v594 = vpack.c.b16 %v561, %v560
      %v595 = vpack.c.b16 %v563, %v562
      %vm596 = vcmask 31744
      %v598 = vsel %vm596, %v564, 0
      %v601 = vsel %vm596, %v565, 0
      %v604 = vsel %vm596, %v566, 0
      %v607 = vsel %vm596, %v567, 0
      %v610 = vsel %vm596, %v568, 0
      %v613 = vsel %vm596, %v569, 0
      %v616 = vsel %vm596, %v570, 0
      %v619 = vsel %vm596, %v571, 0
      %v622 = vsel %vm596, %v572, 0
      %v625 = vsel %vm596, %v573, 0
      %v628 = vsel %vm596, %v574, 0
      %v631 = vsel %vm596, %v575, 0
      %v634 = vsel %vm596, %v576, 0
      %v637 = vsel %vm596, %v577, 0
      %v640 = vsel %vm596, %v578, 0
      %v643 = vsel %vm596, %v579, 0
      %v646 = vsel %vm596, %v580, 0
      %v649 = vsel %vm596, %v581, 0
      %v652 = vsel %vm596, %v582, 0
      %v655 = vsel %vm596, %v583, 0
      %v658 = vsel %vm596, %v584, 0
      %v661 = vsel %vm596, %v585, 0
      %v664 = vsel %vm596, %v586, 0
      %v667 = vsel %vm596, %v587, 0
      %v670 = vsel %vm596, %v588, 0
      %v673 = vsel %vm596, %v589, 0
      %v676 = vsel %vm596, %v590, 0
      %v679 = vsel %vm596, %v591, 0
      %v682 = vsel %vm596, %v592, 0
      %v685 = vsel %vm596, %v593, 0
      %v688 = vsel %vm596, %v594, 0
      %v691 = vsel %vm596, %v595, 0
      %vm693 = vcmask 1041408
      %v695 = vsel %vm693, %v435, 0
      %697 = vmatprep.subr.bf16.mxu0 0
      %698 = vmatpush1.bf16.msra.mxu0 %v695
      %699 = vmatprep.subr.bf16.mxu0 0
      %700 = vmatpush1.bf16.msra.mxu0 0
      %701 = vmatprep.subr.bf16.mxu0 0
      %702 = vmatpush1.bf16.msra.mxu0 0
      %703 = vmatprep.subr.bf16.mxu0 0
      %704 = vmatpush1.bf16.msra.mxu0 0
      %705 = vmatprep.subr.bf16.mxu0 0
      %706 = vmatpush1.bf16.msra.mxu0 0
      %707 = vmatprep.subr.bf16.mxu0 0
      %708 = vmatpush1.bf16.msra.mxu0 0
      %709 = vmatprep.subr.bf16.mxu0 0
      %710 = vmatpush1.bf16.msra.mxu0 0
      %711 = vmatprep.subr.bf16.mxu0 0
      %712 = vmatpush1.bf16.msra.mxu0 0
      %713 = vmatprep.subr.bf16.mxu0 0
      %714 = vmatpush1.bf16.msra.mxu0 0
      %715 = vmatprep.subr.bf16.mxu0 0
      %716 = vmatpush1.bf16.msra.mxu0 0
      %717 = vmatprep.subr.bf16.mxu0 0
      %718 = vmatpush1.bf16.msra.mxu0 0
      %719 = vmatprep.subr.bf16.mxu0 0
      %720 = vmatpush1.bf16.msra.mxu0 0
      %721 = vmatprep.subr.bf16.mxu0 0
      %722 = vmatpush1.bf16.msra.mxu0 0
      %723 = vmatprep.subr.bf16.mxu0 0
      %724 = vmatpush1.bf16.msra.mxu0 0
      %725 = vmatprep.subr.bf16.mxu0 0
      %726 = vmatpush1.bf16.msra.mxu0 0
      %727 = vmatprep.subr.bf16.mxu0 0
      %728 = vmatpush1.bf16.msra.mxu0 0
      %729 = vmatprep.mubr.bf16.mxu0 0
      %730 = vmatmul.mubr.bf16.gmra.mrb[0].mxu0 %v598
      %v731 = vpop.f32.mrb[0].mxu0
      %v732 = vadd.f32 0.0, %v731
      %v733 = vpop.f32.mrb[0].mxu0
      %v734 = vpop.f32.mrb[0].mxu0
      %v735 = vadd.f32 0.0, %v734
      %v736 = vpop.f32.mrb[0].mxu0
      %737 = vmatprep.mubr.bf16.mxu0 0
      %738 = vmatmul.mubr.bf16.gmra.mrb[0].mxu0 %v601
      %v739 = vpop.f32.mrb[0].mxu0
      %v740 = vadd.f32 0.0, %v739
      %v741 = vpop.f32.mrb[0].mxu0
      %v742 = vpop.f32.mrb[0].mxu0
      %v743 = vadd.f32 0.0, %v742
      %v744 = vpop.f32.mrb[0].mxu0
      %745 = vmatprep.mubr.bf16.mxu0 0
      %746 = vmatmul.mubr.bf16.gmra.mrb[0].mxu0 %v604
      %v747 = vpop.f32.mrb[0].mxu0
      %v748 = vadd.f32 0.0, %v747
      %v749 = vpop.f32.mrb[0].mxu0
      %v750 = vpop.f32.mrb[0].mxu0
      %v751 = vadd.f32 0.0, %v750
      %v752 = vpop.f32.mrb[0].mxu0
      %753 = vmatprep.mubr.bf16.mxu0 0
      %754 = vmatmul.mubr.bf16.gmra.mrb[0].mxu0 %v607
      %v755 = vpop.f32.mrb[0].mxu0
      %v756 = vadd.f32 0.0, %v755
      %v757 = vpop.f32.mrb[0].mxu0
      %v758 = vpop.f32.mrb[0].mxu0
      %v759 = vadd.f32 0.0, %v758
      %v760 = vpop.f32.mrb[0].mxu0
      %761 = vmatprep.mubr.bf16.mxu0 0
      %762 = vmatmul.mubr.bf16.gmra.mrb[0].mxu0 %v610
      %v763 = vpop.f32.mrb[0].mxu0
      %v764 = vadd.f32 0.0, %v763
      %v765 = vpop.f32.mrb[0].mxu0
      %v766 = vpop.f32.mrb[0].mxu0
      %v767 = vadd.f32 0.0, %v766
      %v768 = vpop.f32.mrb[0].mxu0
      %769 = vmatprep.mubr.bf16.mxu0 0
      %770 = vmatmul.mubr.bf16.gmra.mrb[0].mxu0 %v613
      %v771 = vpop.f32.mrb[0].mxu0
      %v772 = vadd.f32 0.0, %v771
      %v773 = vpop.f32.mrb[0].mxu0
      %v774 = vpop.f32.mrb[0].mxu0
      %v775 = vadd.f32 0.0, %v774
      %v776 = vpop.f32.mrb[0].mxu0
      %777 = vmatprep.mubr.bf16.mxu0 0
      %778 = vmatmul.mubr.bf16.gmra.mrb[0].mxu0 %v616
      %v779 = vpop.f32.mrb[0].mxu0
      %v780 = vadd.f32 0.0, %v779
      %v781 = vpop.f32.mrb[0].mxu0
      %v782 = vpop.f32.mrb[0].mxu0
      %v783 = vadd.f32 0.0, %v782
      %v784 = vpop.f32.mrb[0].mxu0
      %785 = vmatprep.mubr.bf16.mxu0 0
      %786 = vmatmul.mubr.bf16.gmra.mrb[0].mxu0 %v619
      %v787 = vpop.f32.mrb[0].mxu0
      %v788 = vadd.f32 0.0, %v787
      %v789 = vpop.f32.mrb[0].mxu0
      %v790 = vpop.f32.mrb[0].mxu0
      %v791 = vadd.f32 0.0, %v790
      %v792 = vpop.f32.mrb[0].mxu0
      %793 = vmatprep.mubr.bf16.mxu0 0
      %794 = vmatmul.mubr.bf16.gmra.mrb[0].mxu0 %v622
      %v795 = vpop.f32.mrb[0].mxu0
      %v796 = vadd.f32 0.0, %v795
      %v797 = vpop.f32.mrb[0].mxu0
      %v798 = vpop.f32.mrb[0].mxu0
      %v799 = vadd.f32 0.0, %v798
      %v800 = vpop.f32.mrb[0].mxu0
      %801 = vmatprep.mubr.bf16.mxu0 0
      %802 = vmatmul.mubr.bf16.gmra.mrb[0].mxu0 %v625
      %v803 = vpop.f32.mrb[0].mxu0
      %v804 = vadd.f32 0.0, %v803
      %v805 = vpop.f32.mrb[0].mxu0
      %v806 = vpop.f32.mrb[0].mxu0
      %v807 = vadd.f32 0.0, %v806
      %v808 = vpop.f32.mrb[0].mxu0
      %809 = vmatprep.mubr.bf16.mxu0 0
      %810 = vmatmul.mubr.bf16.gmra.mrb[0].mxu0 %v628
      %v811 = vpop.f32.mrb[0].mxu0
      %v812 = vadd.f32 0.0, %v811
      %v813 = vpop.f32.mrb[0].mxu0
      %v814 = vpop.f32.mrb[0].mxu0
      %v815 = vadd.f32 0.0, %v814
      %v816 = vpop.f32.mrb[0].mxu0
      %817 = vmatprep.mubr.bf16.mxu0 0
      %818 = vmatmul.mubr.bf16.gmra.mrb[0].mxu0 %v631
      %v819 = vpop.f32.mrb[0].mxu0
      %v820 = vadd.f32 0.0, %v819
      %v821 = vpop.f32.mrb[0].mxu0
      %v822 = vpop.f32.mrb[0].mxu0
      %v823 = vadd.f32 0.0, %v822
      %v824 = vpop.f32.mrb[0].mxu0
      %825 = vmatprep.mubr.bf16.mxu0 0
      %826 = vmatmul.mubr.bf16.gmra.mrb[0].mxu0 %v634
      %v827 = vpop.f32.mrb[0].mxu0
      %v828 = vadd.f32 0.0, %v827
      %v829 = vpop.f32.mrb[0].mxu0
      %v830 = vpop.f32.mrb[0].mxu0
      %v831 = vadd.f32 0.0, %v830
      %v832 = vpop.f32.mrb[0].mxu0
      %833 = vmatprep.mubr.bf16.mxu0 0
      %834 = vmatmul.mubr.bf16.gmra.mrb[0].mxu0 %v637
      %v835 = vpop.f32.mrb[0].mxu0
      %v836 = vadd.f32 0.0, %v835
      %v837 = vpop.f32.mrb[0].mxu0
      %v838 = vpop.f32.mrb[0].mxu0
      %v839 = vadd.f32 0.0, %v838
      %v840 = vpop.f32.mrb[0].mxu0
      %841 = vmatprep.mubr.bf16.mxu0 0
      %842 = vmatmul.mubr.bf16.gmra.mrb[0].mxu0 %v640
      %v843 = vpop.f32.mrb[0].mxu0
      %v844 = vadd.f32 0.0, %v843
      %v845 = vpop.f32.mrb[0].mxu0
      %v846 = vpop.f32.mrb[0].mxu0
      %v847 = vadd.f32 0.0, %v846
      %v848 = vpop.f32.mrb[0].mxu0
      %849 = vmatprep.mubr.bf16.mxu0 0
      %850 = vmatmul.mubr.bf16.gmra.mrb[0].mxu0 %v643
      %v851 = vpop.f32.mrb[0].mxu0
      %v852 = vadd.f32 0.0, %v851
      %v853 = vpop.f32.mrb[0].mxu0
      %v854 = vpop.f32.mrb[0].mxu0
      %v855 = vadd.f32 0.0, %v854
      %v856 = vpop.f32.mrb[0].mxu0
      %857 = vmatprep.mubr.bf16.mxu0 0
      %858 = vmatmul.mubr.bf16.gmra.mrb[0].mxu0 %v646
      %v859 = vpop.f32.mrb[0].mxu0
      %v860 = vadd.f32 0.0, %v859
      %v861 = vpop.f32.mrb[0].mxu0
      %v862 = vpop.f32.mrb[0].mxu0
      %v863 = vadd.f32 0.0, %v862
      %v864 = vpop.f32.mrb[0].mxu0
      %865 = vmatprep.mubr.bf16.mxu0 0
      %866 = vmatmul.mubr.bf16.gmra.mrb[0].mxu0 %v649
      %v867 = vpop.f32.mrb[0].mxu0
      %v868 = vadd.f32 0.0, %v867
      %v869 = vpop.f32.mrb[0].mxu0
      %v870 = vpop.f32.mrb[0].mxu0
      %v871 = vadd.f32 0.0, %v870
      %v872 = vpop.f32.mrb[0].mxu0
      %873 = vmatprep.mubr.bf16.mxu0 0
      %874 = vmatmul.mubr.bf16.gmra.mrb[0].mxu0 %v652
      %v875 = vpop.f32.mrb[0].mxu0
      %v876 = vadd.f32 0.0, %v875
      %v877 = vpop.f32.mrb[0].mxu0
      %v878 = vpop.f32.mrb[0].mxu0
      %v879 = vadd.f32 0.0, %v878
      %v880 = vpop.f32.mrb[0].mxu0
      %881 = vmatprep.mubr.bf16.mxu0 0
      %882 = vmatmul.mubr.bf16.gmra.mrb[0].mxu0 %v655
      %v883 = vpop.f32.mrb[0].mxu0
      %v884 = vadd.f32 0.0, %v883
      %v885 = vpop.f32.mrb[0].mxu0
      %v886 = vpop.f32.mrb[0].mxu0
      %v887 = vadd.f32 0.0, %v886
      %v888 = vpop.f32.mrb[0].mxu0
      %889 = vmatprep.mubr.bf16.mxu0 0
      %890 = vmatmul.mubr.bf16.gmra.mrb[0].mxu0 %v658
      %v891 = vpop.f32.mrb[0].mxu0
      %v892 = vadd.f32 0.0, %v891
      %v893 = vpop.f32.mrb[0].mxu0
      %v894 = vpop.f32.mrb[0].mxu0
      %v895 = vadd.f32 0.0, %v894
      %v896 = vpop.f32.mrb[0].mxu0
      %897 = vmatprep.mubr.bf16.mxu0 0
      %898 = vmatmul.mubr.bf16.gmra.mrb[0].mxu0 %v661
      %v899 = vpop.f32.mrb[0].mxu0
      %v900 = vadd.f32 0.0, %v899
      %v901 = vpop.f32.mrb[0].mxu0
      %v902 = vpop.f32.mrb[0].mxu0
      %v903 = vadd.f32 0.0, %v902
      %v904 = vpop.f32.mrb[0].mxu0
      %905 = vmatprep.mubr.bf16.mxu0 0
      %906 = vmatmul.mubr.bf16.gmra.mrb[0].mxu0 %v664
      %v907 = vpop.f32.mrb[0].mxu0
      %v908 = vadd.f32 0.0, %v907
      %v909 = vpop.f32.mrb[0].mxu0
      %v910 = vpop.f32.mrb[0].mxu0
      %v911 = vadd.f32 0.0, %v910
      %v912 = vpop.f32.mrb[0].mxu0
      %913 = vmatprep.mubr.bf16.mxu0 0
      %914 = vmatmul.mubr.bf16.gmra.mrb[0].mxu0 %v667
      %v915 = vpop.f32.mrb[0].mxu0
      %v916 = vadd.f32 0.0, %v915
      %v917 = vpop.f32.mrb[0].mxu0
      %v918 = vpop.f32.mrb[0].mxu0
      %v919 = vadd.f32 0.0, %v918
      %v920 = vpop.f32.mrb[0].mxu0
      %921 = vmatprep.mubr.bf16.mxu0 0
      %922 = vmatmul.mubr.bf16.gmra.mrb[0].mxu0 %v670
      %v923 = vpop.f32.mrb[0].mxu0
      %v924 = vadd.f32 0.0, %v923
      %v925 = vpop.f32.mrb[0].mxu0
      %v926 = vpop.f32.mrb[0].mxu0
      %v927 = vadd.f32 0.0, %v926
      %v928 = vpop.f32.mrb[0].mxu0
      %929 = vmatprep.mubr.bf16.mxu0 0
      %930 = vmatmul.mubr.bf16.gmra.mrb[0].mxu0 %v673
      %v931 = vpop.f32.mrb[0].mxu0
      %v932 = vadd.f32 0.0, %v931
      %v933 = vpop.f32.mrb[0].mxu0
      %v934 = vpop.f32.mrb[0].mxu0
      %v935 = vadd.f32 0.0, %v934
      %v936 = vpop.f32.mrb[0].mxu0
      %937 = vmatprep.mubr.bf16.mxu0 0
      %938 = vmatmul.mubr.bf16.gmra.mrb[0].mxu0 %v676
      %v939 = vpop.f32.mrb[0].mxu0
      %v940 = vadd.f32 0.0, %v939
      %v941 = vpop.f32.mrb[0].mxu0
      %v942 = vpop.f32.mrb[0].mxu0
      %v943 = vadd.f32 0.0, %v942
      %v944 = vpop.f32.mrb[0].mxu0
      %945 = vmatprep.mubr.bf16.mxu0 0
      %946 = vmatmul.mubr.bf16.gmra.mrb[0].mxu0 %v679
      %v947 = vpop.f32.mrb[0].mxu0
      %v948 = vadd.f32 0.0, %v947
      %v949 = vpop.f32.mrb[0].mxu0
      %v950 = vpop.f32.mrb[0].mxu0
      %v951 = vadd.f32 0.0, %v950
      %v952 = vpop.f32.mrb[0].mxu0
      %953 = vmatprep.mubr.bf16.mxu0 0
      %954 = vmatmul.mubr.bf16.gmra.mrb[0].mxu0 %v682
      %v955 = vpop.f32.mrb[0].mxu0
      %v956 = vadd.f32 0.0, %v955
      %v957 = vpop.f32.mrb[0].mxu0
      %v958 = vpop.f32.mrb[0].mxu0
      %v959 = vadd.f32 0.0, %v958
      %v960 = vpop.f32.mrb[0].mxu0
      %961 = vmatprep.mubr.bf16.mxu0 0
      %962 = vmatmul.mubr.bf16.gmra.mrb[0].mxu0 %v685
      %v963 = vpop.f32.mrb[0].mxu0
      %v964 = vadd.f32 0.0, %v963
      %v965 = vpop.f32.mrb[0].mxu0
      %v966 = vpop.f32.mrb[0].mxu0
      %v967 = vadd.f32 0.0, %v966
      %v968 = vpop.f32.mrb[0].mxu0
      %969 = vmatprep.mubr.bf16.mxu0 0
      %970 = vmatmul.mubr.bf16.gmra.mrb[0].mxu0 %v688
      %v971 = vpop.f32.mrb[0].mxu0
      %v972 = vadd.f32 0.0, %v971
      %v973 = vpop.f32.mrb[0].mxu0
      %v974 = vpop.f32.mrb[0].mxu0
      %v975 = vadd.f32 0.0, %v974
      %v976 = vpop.f32.mrb[0].mxu0
      %977 = vmatprep.mubr.bf16.mxu0 0
      %978 = vmatmul.mubr.bf16.gmra.mrb[0].mxu0 %v691
      %v979 = vpop.f32.mrb[0].mxu0
      %v980 = vadd.f32 0.0, %v979
      %v981 = vpop.f32.mrb[0].mxu0
      %v982 = vpop.f32.mrb[0].mxu0
      %v983 = vadd.f32 0.0, %v982
      %v984 = vpop.f32.mrb[0].mxu0
      %985 = vdwg.mxu0
      %v1050 = vunpack.c.l.b16 %v305
      %v1051 = vunpack.c.l.b16 %v306
      %v1052 = vunpack.c.l.b16 %v307
      %v1053 = vunpack.c.l.b16 %v308
      %v1054 = vunpack.c.l.b16 %v309
      %v1055 = vunpack.c.l.b16 %v310
      %v1056 = vunpack.c.l.b16 %v311
      %v1057 = vunpack.c.l.b16 %v312
      %v1058 = vunpack.c.l.b16 %v313
      %v1059 = vunpack.c.l.b16 %v314
      %v1060 = vunpack.c.l.b16 %v315
      %v1061 = vunpack.c.l.b16 %v316
      %v1062 = vunpack.c.l.b16 %v317
      %v1063 = vunpack.c.l.b16 %v318
      %v1064 = vunpack.c.l.b16 %v319
      %v1065 = vunpack.c.l.b16 %v320
      %v1066 = vunpack.c.l.b16 %v321
      %v1067 = vunpack.c.l.b16 %v322
      %v1068 = vunpack.c.l.b16 %v323
      %v1069 = vunpack.c.l.b16 %v324
      %v1070 = vunpack.c.l.b16 %v325
      %v1071 = vunpack.c.l.b16 %v326
      %v1072 = vunpack.c.l.b16 %v327
      %v1073 = vunpack.c.l.b16 %v328
      %v1074 = vunpack.c.l.b16 %v329
      %v1075 = vunpack.c.l.b16 %v330
      %v1076 = vunpack.c.l.b16 %v331
      %v1077 = vunpack.c.l.b16 %v332
      %v1078 = vunpack.c.l.b16 %v333
      %v1079 = vunpack.c.l.b16 %v334
      %v1080 = vunpack.c.l.b16 %v335
      %v1081 = vunpack.c.l.b16 %v336
      %v1082 = vunpack.c.l.b16 %v337
      %v1083 = vunpack.c.l.b16 %v338
      %v1084 = vunpack.c.l.b16 %v339
      %v1085 = vunpack.c.l.b16 %v340
      %v1086 = vunpack.c.l.b16 %v341
      %v1087 = vunpack.c.l.b16 %v342
      %v1088 = vunpack.c.l.b16 %v343
      %v1089 = vunpack.c.l.b16 %v344
      %v1090 = vunpack.c.l.b16 %v345
      %v1091 = vunpack.c.l.b16 %v346
      %v1092 = vunpack.c.l.b16 %v347
      %v1093 = vunpack.c.l.b16 %v348
      %v1094 = vunpack.c.l.b16 %v349
      %v1095 = vunpack.c.l.b16 %v350
      %v1096 = vunpack.c.l.b16 %v351
      %v1097 = vunpack.c.l.b16 %v352
      %v1098 = vunpack.c.l.b16 %v353
      %v1099 = vunpack.c.l.b16 %v354
      %v1100 = vunpack.c.l.b16 %v355
      %v1101 = vunpack.c.l.b16 %v356
      %v1102 = vunpack.c.l.b16 %v357
      %v1103 = vunpack.c.l.b16 %v358
      %v1104 = vunpack.c.l.b16 %v359
      %v1105 = vunpack.c.l.b16 %v360
      %v1106 = vunpack.c.l.b16 %v361
      %v1107 = vunpack.c.l.b16 %v362
      %v1108 = vunpack.c.l.b16 %v363
      %v1109 = vunpack.c.l.b16 %v364
      %v1110 = vunpack.c.l.b16 %v365
      %v1111 = vunpack.c.l.b16 %v366
      %v1112 = vunpack.c.l.b16 %v367
      %v1113 = vunpack.c.l.b16 %v368
      %v1114 = vpack.c.b16 %v1051, %v1050
      %v1115 = vpack.c.b16 %v1053, %v1052
      %v1116 = vpack.c.b16 %v1055, %v1054
      %v1117 = vpack.c.b16 %v1057, %v1056
      %v1118 = vpack.c.b16 %v1059, %v1058
      %v1119 = vpack.c.b16 %v1061, %v1060
      %v1120 = vpack.c.b16 %v1063, %v1062
      %v1121 = vpack.c.b16 %v1065, %v1064
      %v1122 = vpack.c.b16 %v1067, %v1066
      %v1123 = vpack.c.b16 %v1069, %v1068
      %v1124 = vpack.c.b16 %v1071, %v1070
      %v1125 = vpack.c.b16 %v1073, %v1072
      %v1126 = vpack.c.b16 %v1075, %v1074
      %v1127 = vpack.c.b16 %v1077, %v1076
      %v1128 = vpack.c.b16 %v1079, %v1078
      %v1129 = vpack.c.b16 %v1081, %v1080
      %v1130 = vpack.c.b16 %v1083, %v1082
      %v1131 = vpack.c.b16 %v1085, %v1084
      %v1132 = vpack.c.b16 %v1087, %v1086
      %v1133 = vpack.c.b16 %v1089, %v1088
      %v1134 = vpack.c.b16 %v1091, %v1090
      %v1135 = vpack.c.b16 %v1093, %v1092
      %v1136 = vpack.c.b16 %v1095, %v1094
      %v1137 = vpack.c.b16 %v1097, %v1096
      %v1138 = vpack.c.b16 %v1099, %v1098
      %v1139 = vpack.c.b16 %v1101, %v1100
      %v1140 = vpack.c.b16 %v1103, %v1102
      %v1141 = vpack.c.b16 %v1105, %v1104
      %v1142 = vpack.c.b16 %v1107, %v1106
      %v1143 = vpack.c.b16 %v1109, %v1108
      %v1144 = vpack.c.b16 %v1111, %v1110
      %v1145 = vpack.c.b16 %v1113, %v1112
      %v1148 = vunpack.c.l.b16 %v369
      %v1149 = vunpack.c.l.b16 %v370
      %v1150 = vpack.c.b16 %v1149, %v1148
      %vm1152 = vcmask 130048
      %v1154 = vsel %vm1152, %v1114, 0
      %v1157 = vsel %vm1152, %v1115, 0
      %v1160 = vsel %vm1152, %v1116, 0
      %v1163 = vsel %vm1152, %v1117, 0
      %v1166 = vsel %vm1152, %v1118, 0
      %v1169 = vsel %vm1152, %v1119, 0
      %v1172 = vsel %vm1152, %v1120, 0
      %v1175 = vsel %vm1152, %v1121, 0
      %v1178 = vsel %vm1152, %v1122, 0
      %v1181 = vsel %vm1152, %v1123, 0
      %v1184 = vsel %vm1152, %v1124, 0
      %v1187 = vsel %vm1152, %v1125, 0
      %v1190 = vsel %vm1152, %v1126, 0
      %v1193 = vsel %vm1152, %v1127, 0
      %v1196 = vsel %vm1152, %v1128, 0
      %v1199 = vsel %vm1152, %v1129, 0
      %v1202 = vsel %vm1152, %v1130, 0
      %v1205 = vsel %vm1152, %v1131, 0
      %v1208 = vsel %vm1152, %v1132, 0
      %v1211 = vsel %vm1152, %v1133, 0
      %v1214 = vsel %vm1152, %v1134, 0
      %v1217 = vsel %vm1152, %v1135, 0
      %v1220 = vsel %vm1152, %v1136, 0
      %v1223 = vsel %vm1152, %v1137, 0
      %v1226 = vsel %vm1152, %v1138, 0
      %v1229 = vsel %vm1152, %v1139, 0
      %v1232 = vsel %vm1152, %v1140, 0
      %v1235 = vsel %vm1152, %v1141, 0
      %v1238 = vsel %vm1152, %v1142, 0
      %v1241 = vsel %vm1152, %v1143, 0
      %v1244 = vsel %vm1152, %v1144, 0
      %v1247 = vsel %vm1152, %v1145, 0
      %1249 = vmatprep.subr.bf16.mxu0 0
      %1250 = vmatpush1.bf16.msra.mxu0 %v1150
      %1251 = vmatprep.subr.bf16.mxu0 0
      %1252 = vmatpush1.bf16.msra.mxu0 0
      %1253 = vmatprep.subr.bf16.mxu0 0
      %1254 = vmatpush1.bf16.msra.mxu0 0
      %1255 = vmatprep.subr.bf16.mxu0 0
      %1256 = vmatpush1.bf16.msra.mxu0 0
      %1257 = vmatprep.subr.bf16.mxu0 0
      %1258 = vmatpush1.bf16.msra.mxu0 0
      %1259 = vmatprep.subr.bf16.mxu0 0
      %1260 = vmatpush1.bf16.msra.mxu0 0
      %1261 = vmatprep.subr.bf16.mxu0 0
      %1262 = vmatpush1.bf16.msra.mxu0 0
      %1263 = vmatprep.subr.bf16.mxu0 0
      %1264 = vmatpush1.bf16.msra.mxu0 0
      %1265 = vmatprep.subr.bf16.mxu0 0
      %1266 = vmatpush1.bf16.msra.mxu0 0
      %1267 = vmatprep.subr.bf16.mxu0 0
      %1268 = vmatpush1.bf16.msra.mxu0 0
      %1269 = vmatprep.subr.bf16.mxu0 0
      %1270 = vmatpush1.bf16.msra.mxu0 0
      %1271 = vmatprep.subr.bf16.mxu0 0
      %1272 = vmatpush1.bf16.msra.mxu0 0
      %1273 = vmatprep.subr.bf16.mxu0 0
      %1274 = vmatpush1.bf16.msra.mxu0 0
      %1275 = vmatprep.subr.bf16.mxu0 0
      %1276 = vmatpush1.bf16.msra.mxu0 0
      %1277 = vmatprep.subr.bf16.mxu0 0
      %1278 = vmatpush1.bf16.msra.mxu0 0
      %1279 = vmatprep.subr.bf16.mxu0 0
      %1280 = vmatpush1.bf16.msra.mxu0 0
      %1281 = vmatprep.mubr.bf16.mxu0 0
      %1282 = vmatmul.mubr.bf16.gmra.mrb[0].mxu0 %v1154
      %v1283 = vpop.f32.mrb[0].mxu0
      %v1284 = vadd.f32 %v732, %v1283
      %v1285 = vpop.f32.mrb[0].mxu0
      %v1286 = vpop.f32.mrb[0].mxu0
      %v1287 = vadd.f32 %v735, %v1286
      %v1288 = vpop.f32.mrb[0].mxu0
      %1289 = vmatprep.mubr.bf16.mxu0 0
      %1290 = vmatmul.mubr.bf16.gmra.mrb[0].mxu0 %v1157
      %v1291 = vpop.f32.mrb[0].mxu0
      %v1292 = vadd.f32 %v740, %v1291
      %v1293 = vpop.f32.mrb[0].mxu0
      %v1294 = vpop.f32.mrb[0].mxu0
      %v1295 = vadd.f32 %v743, %v1294
      %v1296 = vpop.f32.mrb[0].mxu0
      %1297 = vmatprep.mubr.bf16.mxu0 0
      %1298 = vmatmul.mubr.bf16.gmra.mrb[0].mxu0 %v1160
      %v1299 = vpop.f32.mrb[0].mxu0
      %v1300 = vadd.f32 %v748, %v1299
      %v1301 = vpop.f32.mrb[0].mxu0
      %v1302 = vpop.f32.mrb[0].mxu0
      %v1303 = vadd.f32 %v751, %v1302
      %v1304 = vpop.f32.mrb[0].mxu0
      %1305 = vmatprep.mubr.bf16.mxu0 0
      %1306 = vmatmul.mubr.bf16.gmra.mrb[0].mxu0 %v1163
      %v1307 = vpop.f32.mrb[0].mxu0
      %v1308 = vadd.f32 %v756, %v1307
      %v1309 = vpop.f32.mrb[0].mxu0
      %v1310 = vpop.f32.mrb[0].mxu0
      %v1311 = vadd.f32 %v759, %v1310
      %v1312 = vpop.f32.mrb[0].mxu0
      %1313 = vmatprep.mubr.bf16.mxu0 0
      %1314 = vmatmul.mubr.bf16.gmra.mrb[0].mxu0 %v1166
      %v1315 = vpop.f32.mrb[0].mxu0
      %v1316 = vadd.f32 %v764, %v1315
      %v1317 = vpop.f32.mrb[0].mxu0
      %v1318 = vpop.f32.mrb[0].mxu0
      %v1319 = vadd.f32 %v767, %v1318
      %v1320 = vpop.f32.mrb[0].mxu0
      %1321 = vmatprep.mubr.bf16.mxu0 0
      %1322 = vmatmul.mubr.bf16.gmra.mrb[0].mxu0 %v1169
      %v1323 = vpop.f32.mrb[0].mxu0
      %v1324 = vadd.f32 %v772, %v1323
      %v1325 = vpop.f32.mrb[0].mxu0
      %v1326 = vpop.f32.mrb[0].mxu0
      %v1327 = vadd.f32 %v775, %v1326
      %v1328 = vpop.f32.mrb[0].mxu0
      %1329 = vmatprep.mubr.bf16.mxu0 0
      %1330 = vmatmul.mubr.bf16.gmra.mrb[0].mxu0 %v1172
      %v1331 = vpop.f32.mrb[0].mxu0
      %v1332 = vadd.f32 %v780, %v1331
      %v1333 = vpop.f32.mrb[0].mxu0
      %v1334 = vpop.f32.mrb[0].mxu0
      %v1335 = vadd.f32 %v783, %v1334
      %v1336 = vpop.f32.mrb[0].mxu0
      %1337 = vmatprep.mubr.bf16.mxu0 0
      %1338 = vmatmul.mubr.bf16.gmra.mrb[0].mxu0 %v1175
      %v1339 = vpop.f32.mrb[0].mxu0
      %v1340 = vadd.f32 %v788, %v1339
      %v1341 = vpop.f32.mrb[0].mxu0
      %v1342 = vpop.f32.mrb[0].mxu0
      %v1343 = vadd.f32 %v791, %v1342
      %v1344 = vpop.f32.mrb[0].mxu0
      %1345 = vmatprep.mubr.bf16.mxu0 0
      %1346 = vmatmul.mubr.bf16.gmra.mrb[0].mxu0 %v1178
      %v1347 = vpop.f32.mrb[0].mxu0
      %v1348 = vadd.f32 %v796, %v1347
      %v1349 = vpop.f32.mrb[0].mxu0
      %v1350 = vpop.f32.mrb[0].mxu0
      %v1351 = vadd.f32 %v799, %v1350
      %v1352 = vpop.f32.mrb[0].mxu0
      %1353 = vmatprep.mubr.bf16.mxu0 0
      %1354 = vmatmul.mubr.bf16.gmra.mrb[0].mxu0 %v1181
      %v1355 = vpop.f32.mrb[0].mxu0
      %v1356 = vadd.f32 %v804, %v1355
      %v1357 = vpop.f32.mrb[0].mxu0
      %v1358 = vpop.f32.mrb[0].mxu0
      %v1359 = vadd.f32 %v807, %v1358
      %v1360 = vpop.f32.mrb[0].mxu0
      %1361 = vmatprep.mubr.bf16.mxu0 0
      %1362 = vmatmul.mubr.bf16.gmra.mrb[0].mxu0 %v1184
      %v1363 = vpop.f32.mrb[0].mxu0
      %v1364 = vadd.f32 %v812, %v1363
      %v1365 = vpop.f32.mrb[0].mxu0
      %v1366 = vpop.f32.mrb[0].mxu0
      %v1367 = vadd.f32 %v815, %v1366
      %v1368 = vpop.f32.mrb[0].mxu0
      %1369 = vmatprep.mubr.bf16.mxu0 0
      %1370 = vmatmul.mubr.bf16.gmra.mrb[0].mxu0 %v1187
      %v1371 = vpop.f32.mrb[0].mxu0
      %v1372 = vadd.f32 %v820, %v1371
      %v1373 = vpop.f32.mrb[0].mxu0
      %v1374 = vpop.f32.mrb[0].mxu0
      %v1375 = vadd.f32 %v823, %v1374
      %v1376 = vpop.f32.mrb[0].mxu0
      %1377 = vmatprep.mubr.bf16.mxu0 0
      %1378 = vmatmul.mubr.bf16.gmra.mrb[0].mxu0 %v1190
      %v1379 = vpop.f32.mrb[0].mxu0
      %v1380 = vadd.f32 %v828, %v1379
      %v1381 = vpop.f32.mrb[0].mxu0
      %v1382 = vpop.f32.mrb[0].mxu0
      %v1383 = vadd.f32 %v831, %v1382
      %v1384 = vpop.f32.mrb[0].mxu0
      %1385 = vmatprep.mubr.bf16.mxu0 0
      %1386 = vmatmul.mubr.bf16.gmra.mrb[0].mxu0 %v1193
      %v1387 = vpop.f32.mrb[0].mxu0
      %v1388 = vadd.f32 %v836, %v1387
      %v1389 = vpop.f32.mrb[0].mxu0
      %v1390 = vpop.f32.mrb[0].mxu0
      %v1391 = vadd.f32 %v839, %v1390
      %v1392 = vpop.f32.mrb[0].mxu0
      %1393 = vmatprep.mubr.bf16.mxu0 0
      %1394 = vmatmul.mubr.bf16.gmra.mrb[0].mxu0 %v1196
      %v1395 = vpop.f32.mrb[0].mxu0
      %v1396 = vadd.f32 %v844, %v1395
      %v1397 = vpop.f32.mrb[0].mxu0
      %v1398 = vpop.f32.mrb[0].mxu0
      %v1399 = vadd.f32 %v847, %v1398
      %v1400 = vpop.f32.mrb[0].mxu0
      %1401 = vmatprep.mubr.bf16.mxu0 0
      %1402 = vmatmul.mubr.bf16.gmra.mrb[0].mxu0 %v1199
      %v1403 = vpop.f32.mrb[0].mxu0
      %v1404 = vadd.f32 %v852, %v1403
      %v1405 = vpop.f32.mrb[0].mxu0
      %v1406 = vpop.f32.mrb[0].mxu0
      %v1407 = vadd.f32 %v855, %v1406
      %v1408 = vpop.f32.mrb[0].mxu0
      %1409 = vmatprep.mubr.bf16.mxu0 0
      %1410 = vmatmul.mubr.bf16.gmra.mrb[0].mxu0 %v1202
      %v1411 = vpop.f32.mrb[0].mxu0
      %v1412 = vadd.f32 %v860, %v1411
      %v1413 = vpop.f32.mrb[0].mxu0
      %v1414 = vpop.f32.mrb[0].mxu0
      %v1415 = vadd.f32 %v863, %v1414
      %v1416 = vpop.f32.mrb[0].mxu0
      %1417 = vmatprep.mubr.bf16.mxu0 0
      %1418 = vmatmul.mubr.bf16.gmra.mrb[0].mxu0 %v1205
      %v1419 = vpop.f32.mrb[0].mxu0
      %v1420 = vadd.f32 %v868, %v1419
      %v1421 = vpop.f32.mrb[0].mxu0
      %v1422 = vpop.f32.mrb[0].mxu0
      %v1423 = vadd.f32 %v871, %v1422
      %v1424 = vpop.f32.mrb[0].mxu0
      %1425 = vmatprep.mubr.bf16.mxu0 0
      %1426 = vmatmul.mubr.bf16.gmra.mrb[0].mxu0 %v1208
      %v1427 = vpop.f32.mrb[0].mxu0
      %v1428 = vadd.f32 %v876, %v1427
      %v1429 = vpop.f32.mrb[0].mxu0
      %v1430 = vpop.f32.mrb[0].mxu0
      %v1431 = vadd.f32 %v879, %v1430
      %v1432 = vpop.f32.mrb[0].mxu0
      %1433 = vmatprep.mubr.bf16.mxu0 0
      %1434 = vmatmul.mubr.bf16.gmra.mrb[0].mxu0 %v1211
      %v1435 = vpop.f32.mrb[0].mxu0
      %v1436 = vadd.f32 %v884, %v1435
      %v1437 = vpop.f32.mrb[0].mxu0
      %v1438 = vpop.f32.mrb[0].mxu0
      %v1439 = vadd.f32 %v887, %v1438
      %v1440 = vpop.f32.mrb[0].mxu0
      %1441 = vmatprep.mubr.bf16.mxu0 0
      %1442 = vmatmul.mubr.bf16.gmra.mrb[0].mxu0 %v1214
      %v1443 = vpop.f32.mrb[0].mxu0
      %v1444 = vadd.f32 %v892, %v1443
      %v1445 = vpop.f32.mrb[0].mxu0
      %v1446 = vpop.f32.mrb[0].mxu0
      %v1447 = vadd.f32 %v895, %v1446
      %v1448 = vpop.f32.mrb[0].mxu0
      %1449 = vmatprep.mubr.bf16.mxu0 0
      %1450 = vmatmul.mubr.bf16.gmra.mrb[0].mxu0 %v1217
      %v1451 = vpop.f32.mrb[0].mxu0
      %v1452 = vadd.f32 %v900, %v1451
      %v1453 = vpop.f32.mrb[0].mxu0
      %v1454 = vpop.f32.mrb[0].mxu0
      %v1455 = vadd.f32 %v903, %v1454
      %v1456 = vpop.f32.mrb[0].mxu0
      %1457 = vmatprep.mubr.bf16.mxu0 0
      %1458 = vmatmul.mubr.bf16.gmra.mrb[0].mxu0 %v1220
      %v1459 = vpop.f32.mrb[0].mxu0
      %v1460 = vadd.f32 %v908, %v1459
      %v1461 = vpop.f32.mrb[0].mxu0
      %v1462 = vpop.f32.mrb[0].mxu0
      %v1463 = vadd.f32 %v911, %v1462
      %v1464 = vpop.f32.mrb[0].mxu0
      %1465 = vmatprep.mubr.bf16.mxu0 0
      %1466 = vmatmul.mubr.bf16.gmra.mrb[0].mxu0 %v1223
      %v1467 = vpop.f32.mrb[0].mxu0
      %v1468 = vadd.f32 %v916, %v1467
      %v1469 = vpop.f32.mrb[0].mxu0
      %v1470 = vpop.f32.mrb[0].mxu0
      %v1471 = vadd.f32 %v919, %v1470
      %v1472 = vpop.f32.mrb[0].mxu0
      %1473 = vmatprep.mubr.bf16.mxu0 0
      %1474 = vmatmul.mubr.bf16.gmra.mrb[0].mxu0 %v1226
      %v1475 = vpop.f32.mrb[0].mxu0
      %v1476 = vadd.f32 %v924, %v1475
      %v1477 = vpop.f32.mrb[0].mxu0
      %v1478 = vpop.f32.mrb[0].mxu0
      %v1479 = vadd.f32 %v927, %v1478
      %v1480 = vpop.f32.mrb[0].mxu0
      %1481 = vmatprep.mubr.bf16.mxu0 0
      %1482 = vmatmul.mubr.bf16.gmra.mrb[0].mxu0 %v1229
      %v1483 = vpop.f32.mrb[0].mxu0
      %v1484 = vadd.f32 %v932, %v1483
      %v1485 = vpop.f32.mrb[0].mxu0
      %v1486 = vpop.f32.mrb[0].mxu0
      %v1487 = vadd.f32 %v935, %v1486
      %v1488 = vpop.f32.mrb[0].mxu0
      %1489 = vmatprep.mubr.bf16.mxu0 0
      %1490 = vmatmul.mubr.bf16.gmra.mrb[0].mxu0 %v1232
      %v1491 = vpop.f32.mrb[0].mxu0
      %v1492 = vadd.f32 %v940, %v1491
      %v1493 = vpop.f32.mrb[0].mxu0
      %v1494 = vpop.f32.mrb[0].mxu0
      %v1495 = vadd.f32 %v943, %v1494
      %v1496 = vpop.f32.mrb[0].mxu0
      %1497 = vmatprep.mubr.bf16.mxu0 0
      %1498 = vmatmul.mubr.bf16.gmra.mrb[0].mxu0 %v1235
      %v1499 = vpop.f32.mrb[0].mxu0
      %v1500 = vadd.f32 %v948, %v1499
      %v1501 = vpop.f32.mrb[0].mxu0
      %v1502 = vpop.f32.mrb[0].mxu0
      %v1503 = vadd.f32 %v951, %v1502
      %v1504 = vpop.f32.mrb[0].mxu0
      %1505 = vmatprep.mubr.bf16.mxu0 0
      %1506 = vmatmul.mubr.bf16.gmra.mrb[0].mxu0 %v1238
      %v1507 = vpop.f32.mrb[0].mxu0
      %v1508 = vadd.f32 %v956, %v1507
      %v1509 = vpop.f32.mrb[0].mxu0
      %v1510 = vpop.f32.mrb[0].mxu0
      %v1511 = vadd.f32 %v959, %v1510
      %v1512 = vpop.f32.mrb[0].mxu0
      %1513 = vmatprep.mubr.bf16.mxu0 0
      %1514 = vmatmul.mubr.bf16.gmra.mrb[0].mxu0 %v1241
      %v1515 = vpop.f32.mrb[0].mxu0
      %v1516 = vadd.f32 %v964, %v1515
      %v1517 = vpop.f32.mrb[0].mxu0
      %v1518 = vpop.f32.mrb[0].mxu0
      %v1519 = vadd.f32 %v967, %v1518
      %v1520 = vpop.f32.mrb[0].mxu0
      %1521 = vmatprep.mubr.bf16.mxu0 0
      %1522 = vmatmul.mubr.bf16.gmra.mrb[0].mxu0 %v1244
      %v1523 = vpop.f32.mrb[0].mxu0
      %v1524 = vadd.f32 %v972, %v1523
      %v1525 = vpop.f32.mrb[0].mxu0
      %v1526 = vpop.f32.mrb[0].mxu0
      %v1527 = vadd.f32 %v975, %v1526
      %v1528 = vpop.f32.mrb[0].mxu0
      %1529 = vmatprep.mubr.bf16.mxu0 0
      %1530 = vmatmul.mubr.bf16.gmra.mrb[0].mxu0 %v1247
      %v1531 = vpop.f32.mrb[0].mxu0
      %v1532 = vadd.f32 %v980, %v1531
      %v1533 = vpop.f32.mrb[0].mxu0
      %v1534 = vpop.f32.mrb[0].mxu0
      %v1535 = vadd.f32 %v983, %v1534
      %v1536 = vpop.f32.mrb[0].mxu0
      %1537 = vdwg.mxu0
      %v1538 = vld [vmem:[%s4] sm:$0x1]
      %v1540 = vlaneseq
      %v1541 = vshrl.u32 %v1540, 7
      %v1542 = vsub.s32 0, %v1541
      %v1543 = vrot.slane %v1538, %v1542
      %v1545 = vadd.f32 %v1284, %v1543
      %v1546 = vadd.f32 %v1287, %v1543
      %v1547 = vadd.f32 %v1292, %v1543
      %v1548 = vadd.f32 %v1295, %v1543
      %v1549 = vadd.f32 %v1300, %v1543
      %v1550 = vadd.f32 %v1303, %v1543
      %v1551 = vadd.f32 %v1308, %v1543
      %v1552 = vadd.f32 %v1311, %v1543
      %v1553 = vadd.f32 %v1316, %v1543
      %v1554 = vadd.f32 %v1319, %v1543
      %v1555 = vadd.f32 %v1324, %v1543
      %v1556 = vadd.f32 %v1327, %v1543
      %v1557 = vadd.f32 %v1332, %v1543
      %v1558 = vadd.f32 %v1335, %v1543
      %v1559 = vadd.f32 %v1340, %v1543
      %v1560 = vadd.f32 %v1343, %v1543
      %v1561 = vadd.f32 %v1348, %v1543
      %v1562 = vadd.f32 %v1351, %v1543
      %v1563 = vadd.f32 %v1356, %v1543
      %v1564 = vadd.f32 %v1359, %v1543
      %v1565 = vadd.f32 %v1364, %v1543
      %v1566 = vadd.f32 %v1367, %v1543
      %v1567 = vadd.f32 %v1372, %v1543
      %v1568 = vadd.f32 %v1375, %v1543
      %v1569 = vadd.f32 %v1380, %v1543
      %v1570 = vadd.f32 %v1383, %v1543
      %v1571 = vadd.f32 %v1388, %v1543
      %v1572 = vadd.f32 %v1391, %v1543
      %v1573 = vadd.f32 %v1396, %v1543
      %v1574 = vadd.f32 %v1399, %v1543
      %v1575 = vadd.f32 %v1404, %v1543
      %v1576 = vadd.f32 %v1407, %v1543
      %v1577 = vadd.f32 %v1412, %v1543
      %v1578 = vadd.f32 %v1415, %v1543
      %v1579 = vadd.f32 %v1420, %v1543
      %v1580 = vadd.f32 %v1423, %v1543
      %v1581 = vadd.f32 %v1428, %v1543
      %v1582 = vadd.f32 %v1431, %v1543
      %v1583 = vadd.f32 %v1436, %v1543
      %v1584 = vadd.f32 %v1439, %v1543
      %v1585 = vadd.f32 %v1444, %v1543
      %v1586 = vadd.f32 %v1447, %v1543
      %v1587 = vadd.f32 %v1452, %v1543
      %v1588 = vadd.f32 %v1455, %v1543
      %v1589 = vadd.f32 %v1460, %v1543
      %v1590 = vadd.f32 %v1463, %v1543
      %v1591 = vadd.f32 %v1468, %v1543
      %v1592 = vadd.f32 %v1471, %v1543
      %v1593 = vadd.f32 %v1476, %v1543
      %v1594 = vadd.f32 %v1479, %v1543
      %v1595 = vadd.f32 %v1484, %v1543
      %v1596 = vadd.f32 %v1487, %v1543
      %v1597 = vadd.f32 %v1492, %v1543
      %v1598 = vadd.f32 %v1495, %v1543
      %v1599 = vadd.f32 %v1500, %v1543
      %v1600 = vadd.f32 %v1503, %v1543
      %v1601 = vadd.f32 %v1508, %v1543
      %v1602 = vadd.f32 %v1511, %v1543
      %v1603 = vadd.f32 %v1516, %v1543
      %v1604 = vadd.f32 %v1519, %v1543
      %v1605 = vadd.f32 %v1524, %v1543
      %v1606 = vadd.f32 %v1527, %v1543
      %v1607 = vadd.f32 %v1532, %v1543
      %v1608 = vadd.f32 %v1535, %v1543
      %v1609 = vmax.f32 %v1545, 0.0
      %v1610 = vmax.f32 %v1546, 0.0
      %v1611 = vmax.f32 %v1547, 0.0
      %v1612 = vmax.f32 %v1548, 0.0
      %v1613 = vmax.f32 %v1549, 0.0
      %v1614 = vmax.f32 %v1550, 0.0
      %v1615 = vmax.f32 %v1551, 0.0
      %v1616 = vmax.f32 %v1552, 0.0
      %v1617 = vmax.f32 %v1553, 0.0
      %v1618 = vmax.f32 %v1554, 0.0
      %v1619 = vmax.f32 %v1555, 0.0
      %v1620 = vmax.f32 %v1556, 0.0
      %v1621 = vmax.f32 %v1557, 0.0
      %v1622 = vmax.f32 %v1558, 0.0
      %v1623 = vmax.f32 %v1559, 0.0
      %v1624 = vmax.f32 %v1560, 0.0
      %v1625 = vmax.f32 %v1561, 0.0
      %v1626 = vmax.f32 %v1562, 0.0
      %v1627 = vmax.f32 %v1563, 0.0
      %v1628 = vmax.f32 %v1564, 0.0
      %v1629 = vmax.f32 %v1565, 0.0
      %v1630 = vmax.f32 %v1566, 0.0
      %v1631 = vmax.f32 %v1567, 0.0
      %v1632 = vmax.f32 %v1568, 0.0
      %v1633 = vmax.f32 %v1569, 0.0
      %v1634 = vmax.f32 %v1570, 0.0
      %v1635 = vmax.f32 %v1571, 0.0
      %v1636 = vmax.f32 %v1572, 0.0
      %v1637 = vmax.f32 %v1573, 0.0
      %v1638 = vmax.f32 %v1574, 0.0
      %v1639 = vmax.f32 %v1575, 0.0
      %v1640 = vmax.f32 %v1576, 0.0
      %v1641 = vmax.f32 %v1577, 0.0
      %v1642 = vmax.f32 %v1578, 0.0
      %v1643 = vmax.f32 %v1579, 0.0
      %v1644 = vmax.f32 %v1580, 0.0
      %v1645 = vmax.f32 %v1581, 0.0
      %v1646 = vmax.f32 %v1582, 0.0
      %v1647 = vmax.f32 %v1583, 0.0
      %v1648 = vmax.f32 %v1584, 0.0
      %v1649 = vmax.f32 %v1585, 0.0
      %v1650 = vmax.f32 %v1586, 0.0
      %v1651 = vmax.f32 %v1587, 0.0
      %v1652 = vmax.f32 %v1588, 0.0
      %v1653 = vmax.f32 %v1589, 0.0
      %v1654 = vmax.f32 %v1590, 0.0
      %v1655 = vmax.f32 %v1591, 0.0
      %v1656 = vmax.f32 %v1592, 0.0
      %v1657 = vmax.f32 %v1593, 0.0
      %v1658 = vmax.f32 %v1594, 0.0
      %v1659 = vmax.f32 %v1595, 0.0
      %v1660 = vmax.f32 %v1596, 0.0
      %v1661 = vmax.f32 %v1597, 0.0
      %v1662 = vmax.f32 %v1598, 0.0
      %v1663 = vmax.f32 %v1599, 0.0
      %v1664 = vmax.f32 %v1600, 0.0
      %v1665 = vmax.f32 %v1601, 0.0
      %v1666 = vmax.f32 %v1602, 0.0
      %v1667 = vmax.f32 %v1603, 0.0
      %v1668 = vmax.f32 %v1604, 0.0
      %v1669 = vmax.f32 %v1605, 0.0
      %v1670 = vmax.f32 %v1606, 0.0
      %v1671 = vmax.f32 %v1607, 0.0
      %v1672 = vmax.f32 %v1608, 0.0
      %v1673 = vld [vmem:[%s5] sm:$0xff]
      %v1674 = vld [vmem:[%s5 + $0x8] sm:$0xff]
      %v1675 = vld [vmem:[%s5 + $0x10] sm:$0xff]
      %v1676 = vld [vmem:[%s5 + $0x18] sm:$0xff]
      %v1677 = vld [vmem:[%s5 + $0x20] sm:$0xff]
      %v1678 = vld [vmem:[%s5 + $0x28] sm:$0xff]
      %v1679 = vld [vmem:[%s5 + $0x30] sm:$0xff]
      %v1680 = vld [vmem:[%s5 + $0x38] sm:$0xff]
      %v1681 = vld [vmem:[%s5 + $0x40] sm:$0xff]
      %v1682 = vld [vmem:[%s5 + $0x48] sm:$0xff]
      %v1683 = vld [vmem:[%s5 + $0x50] sm:$0xff]
      %v1684 = vld [vmem:[%s5 + $0x58] sm:$0xff]
      %v1685 = vld [vmem:[%s5 + $0x60] sm:$0xff]
      %v1686 = vld [vmem:[%s5 + $0x68] sm:$0xff]
      %v1687 = vld [vmem:[%s5 + $0x70] sm:$0xff]
      %v1688 = vld [vmem:[%s5 + $0x78] sm:$0xff]
      %v1689 = vld [vmem:[%s6] sm:$0x3]
      %v1690 = vpack.c.bf16 %v1610, %v1609
      %v1691 = vpack.c.bf16 %v1612, %v1611
      %v1692 = vpack.c.bf16 %v1614, %v1613
      %v1693 = vpack.c.bf16 %v1616, %v1615
      %v1694 = vpack.c.bf16 %v1618, %v1617
      %v1695 = vpack.c.bf16 %v1620, %v1619
      %v1696 = vpack.c.bf16 %v1622, %v1621
      %v1697 = vpack.c.bf16 %v1624, %v1623
      %v1698 = vpack.c.bf16 %v1626, %v1625
      %v1699 = vpack.c.bf16 %v1628, %v1627
      %v1700 = vpack.c.bf16 %v1630, %v1629
      %v1701 = vpack.c.bf16 %v1632, %v1631
      %v1702 = vpack.c.bf16 %v1634, %v1633
      %v1703 = vpack.c.bf16 %v1636, %v1635
      %v1704 = vpack.c.bf16 %v1638, %v1637
      %v1705 = vpack.c.bf16 %v1640, %v1639
      %v1706 = vpack.c.bf16 %v1642, %v1641
      %v1707 = vpack.c.bf16 %v1644, %v1643
      %v1708 = vpack.c.bf16 %v1646, %v1645
      %v1709 = vpack.c.bf16 %v1648, %v1647
      %v1710 = vpack.c.bf16 %v1650, %v1649
      %v1711 = vpack.c.bf16 %v1652, %v1651
      %v1712 = vpack.c.bf16 %v1654, %v1653
      %v1713 = vpack.c.bf16 %v1656, %v1655
      %v1714 = vpack.c.bf16 %v1658, %v1657
      %v1715 = vpack.c.bf16 %v1660, %v1659
      %v1716 = vpack.c.bf16 %v1662, %v1661
      %v1717 = vpack.c.bf16 %v1664, %v1663
      %v1718 = vpack.c.bf16 %v1666, %v1665
      %v1719 = vpack.c.bf16 %v1668, %v1667
      %v1720 = vpack.c.bf16 %v1670, %v1669
      %v1721 = vpack.c.bf16 %v1672, %v1671
      %v1723 = vlaneseq
      %v1724 = vshrl.u32 %v1723, 7
      %v1725 = vsub.s32 0, %v1724
      %v1726 = vrot.slane %v1689, %v1725
      %v1727 = vlaneseq
      %v1728 = vshrl.u32 %v1727, 7
      %v1729 = vsub.s32 1, %v1728
      %v1730 = vrot.slane %v1689, %v1729
      %v1749 = vunpack.c.l.b16 %v1673
      %v1750 = vunpack.c.h.b16 %v1673
      %v1751 = vunpack.c.l.b16 %v1674
      %v1752 = vunpack.c.h.b16 %v1674
      %v1753 = vunpack.c.l.b16 %v1675
      %v1754 = vunpack.c.h.b16 %v1675
      %v1755 = vunpack.c.l.b16 %v1676
      %v1756 = vunpack.c.h.b16 %v1676
      %v1757 = vunpack.c.l.b16 %v1677
      %v1758 = vunpack.c.h.b16 %v1677
      %v1759 = vunpack.c.l.b16 %v1678
      %v1760 = vunpack.c.h.b16 %v1678
      %v1761 = vunpack.c.l.b16 %v1679
      %v1762 = vunpack.c.h.b16 %v1679
      %v1763 = vunpack.c.l.b16 %v1680
      %v1764 = vunpack.c.h.b16 %v1680
      %v1765 = vunpack.c.l.b16 %v1681
      %v1766 = vunpack.c.h.b16 %v1681
      %v1767 = vunpack.c.l.b16 %v1682
      %v1768 = vunpack.c.h.b16 %v1682
      %v1769 = vunpack.c.l.b16 %v1683
      %v1770 = vunpack.c.h.b16 %v1683
      %v1771 = vunpack.c.l.b16 %v1684
      %v1772 = vunpack.c.h.b16 %v1684
      %v1773 = vunpack.c.l.b16 %v1685
      %v1774 = vunpack.c.h.b16 %v1685
      %v1775 = vunpack.c.l.b16 %v1686
      %v1776 = vunpack.c.h.b16 %v1686
      %v1777 = vunpack.c.l.b16 %v1687
      %v1778 = vunpack.c.h.b16 %v1687
      %v1779 = vunpack.c.l.b16 %v1688
      %v1780 = vunpack.c.h.b16 %v1688
      %v1781 = vpack.c.b16 %v1751, %v1749
      %v1782 = vpack.c.b16 %v1752, %v1750
      %v1783 = vpack.c.b16 %v1755, %v1753
      %v1784 = vpack.c.b16 %v1756, %v1754
      %v1785 = vpack.c.b16 %v1759, %v1757
      %v1786 = vpack.c.b16 %v1760, %v1758
      %v1787 = vpack.c.b16 %v1763, %v1761
      %v1788 = vpack.c.b16 %v1764, %v1762
      %v1789 = vpack.c.b16 %v1767, %v1765
      %v1790 = vpack.c.b16 %v1768, %v1766
      %v1791 = vpack.c.b16 %v1771, %v1769
      %v1792 = vpack.c.b16 %v1772, %v1770
      %v1793 = vpack.c.b16 %v1775, %v1773
      %v1794 = vpack.c.b16 %v1776, %v1774
      %v1795 = vpack.c.b16 %v1779, %v1777
      %v1796 = vpack.c.b16 %v1780, %v1778
      %1813 = vmatprep.subr.bf16.mxu0 %v1782
      %1814 = vmatpush1.bf16.msra.mxu0 %v1781
      %1815 = vmatprep.subr.bf16.mxu0 %v1784
      %1816 = vmatpush1.bf16.msra.mxu0 %v1783
      %1817 = vmatprep.subr.bf16.mxu0 %v1786
      %1818 = vmatpush1.bf16.msra.mxu0 %v1785
      %1819 = vmatprep.subr.bf16.mxu0 %v1788
      %1820 = vmatpush1.bf16.msra.mxu0 %v1787
      %1821 = vmatprep.subr.bf16.mxu0 %v1790
      %1822 = vmatpush1.bf16.msra.mxu0 %v1789
      %1823 = vmatprep.subr.bf16.mxu0 %v1792
      %1824 = vmatpush1.bf16.msra.mxu0 %v1791
      %1825 = vmatprep.subr.bf16.mxu0 %v1794
      %1826 = vmatpush1.bf16.msra.mxu0 %v1793
      %1827 = vmatprep.subr.bf16.mxu0 %v1796
      %1828 = vmatpush1.bf16.msra.mxu0 %v1795
      %1829 = vmatprep.subr.bf16.mxu0 0
      %1830 = vmatpush1.bf16.msra.mxu0 0
      %1831 = vmatprep.subr.bf16.mxu0 0
      %1832 = vmatpush1.bf16.msra.mxu0 0
      %1833 = vmatprep.subr.bf16.mxu0 0
      %1834 = vmatpush1.bf16.msra.mxu0 0
      %1835 = vmatprep.subr.bf16.mxu0 0
      %1836 = vmatpush1.bf16.msra.mxu0 0
      %1837 = vmatprep.subr.bf16.mxu0 0
      %1838 = vmatpush1.bf16.msra.mxu0 0
      %1839 = vmatprep.subr.bf16.mxu0 0
      %1840 = vmatpush1.bf16.msra.mxu0 0
      %1841 = vmatprep.subr.bf16.mxu0 0
      %1842 = vmatpush1.bf16.msra.mxu0 0
      %1843 = vmatprep.subr.bf16.mxu0 0
      %1844 = vmatpush1.bf16.msra.mxu0 0
      %1845 = vmatprep.mubr.bf16.mxu0 0
      %1846 = vmatmul.mubr.bf16.gmra.mrb[0].mxu0 %v1690
      %v1847 = vpop.f32.mrb[0].mxu0
      %v1848 = vadd.f32 %v1726, %v1847
      %v1849 = vpop.f32.mrb[0].mxu0
      %v1850 = vadd.f32 %v1730, %v1849
      %v1851 = vpop.f32.mrb[0].mxu0
      %v1852 = vadd.f32 %v1726, %v1851
      %v1853 = vpop.f32.mrb[0].mxu0
      %v1854 = vadd.f32 %v1730, %v1853
      %1855 = vmatprep.mubr.bf16.mxu0 0
      %1856 = vmatmul.mubr.bf16.gmra.mrb[0].mxu0 %v1691
      %v1857 = vpop.f32.mrb[0].mxu0
      %v1858 = vadd.f32 %v1726, %v1857
      %v1859 = vpop.f32.mrb[0].mxu0
      %v1860 = vadd.f32 %v1730, %v1859
      %v1861 = vpop.f32.mrb[0].mxu0
      %v1862 = vadd.f32 %v1726, %v1861
      %v1863 = vpop.f32.mrb[0].mxu0
      %v1864 = vadd.f32 %v1730, %v1863
      %1865 = vmatprep.mubr.bf16.mxu0 0
      %1866 = vmatmul.mubr.bf16.gmra.mrb[0].mxu0 %v1692
      %v1867 = vpop.f32.mrb[0].mxu0
      %v1868 = vadd.f32 %v1726, %v1867
      %v1869 = vpop.f32.mrb[0].mxu0
      %v1870 = vadd.f32 %v1730, %v1869
      %v1871 = vpop.f32.mrb[0].mxu0
      %v1872 = vadd.f32 %v1726, %v1871
      %v1873 = vpop.f32.mrb[0].mxu0
      %v1874 = vadd.f32 %v1730, %v1873
      %1875 = vmatprep.mubr.bf16.mxu0 0
      %1876 = vmatmul.mubr.bf16.gmra.mrb[0].mxu0 %v1693
      %v1877 = vpop.f32.mrb[0].mxu0
      %v1878 = vadd.f32 %v1726, %v1877
      %v1879 = vpop.f32.mrb[0].mxu0
      %v1880 = vadd.f32 %v1730, %v1879
      %v1881 = vpop.f32.mrb[0].mxu0
      %v1882 = vadd.f32 %v1726, %v1881
      %v1883 = vpop.f32.mrb[0].mxu0
      %v1884 = vadd.f32 %v1730, %v1883
      %1885 = vmatprep.mubr.bf16.mxu0 0
      %1886 = vmatmul.mubr.bf16.gmra.mrb[0].mxu0 %v1694
      %v1887 = vpop.f32.mrb[0].mxu0
      %v1888 = vadd.f32 %v1726, %v1887
      %v1889 = vpop.f32.mrb[0].mxu0
      %v1890 = vadd.f32 %v1730, %v1889
      %v1891 = vpop.f32.mrb[0].mxu0
      %v1892 = vadd.f32 %v1726, %v1891
      %v1893 = vpop.f32.mrb[0].mxu0
      %v1894 = vadd.f32 %v1730, %v1893
      %1895 = vmatprep.mubr.bf16.mxu0 0
      %1896 = vmatmul.mubr.bf16.gmra.mrb[0].mxu0 %v1695
      %v1897 = vpop.f32.mrb[0].mxu0
      %v1898 = vadd.f32 %v1726, %v1897
      %v1899 = vpop.f32.mrb[0].mxu0
      %v1900 = vadd.f32 %v1730, %v1899
      %v1901 = vpop.f32.mrb[0].mxu0
      %v1902 = vadd.f32 %v1726, %v1901
      %v1903 = vpop.f32.mrb[0].mxu0
      %v1904 = vadd.f32 %v1730, %v1903
      %1905 = vmatprep.mubr.bf16.mxu0 0
      %1906 = vmatmul.mubr.bf16.gmra.mrb[0].mxu0 %v1696
      %v1907 = vpop.f32.mrb[0].mxu0
      %v1908 = vadd.f32 %v1726, %v1907
      %v1909 = vpop.f32.mrb[0].mxu0
      %v1910 = vadd.f32 %v1730, %v1909
      %v1911 = vpop.f32.mrb[0].mxu0
      %v1912 = vadd.f32 %v1726, %v1911
      %v1913 = vpop.f32.mrb[0].mxu0
      %v1914 = vadd.f32 %v1730, %v1913
      %1915 = vmatprep.mubr.bf16.mxu0 0
      %1916 = vmatmul.mubr.bf16.gmra.mrb[0].mxu0 %v1697
      %v1917 = vpop.f32.mrb[0].mxu0
      %v1918 = vadd.f32 %v1726, %v1917
      %v1919 = vpop.f32.mrb[0].mxu0
      %v1920 = vadd.f32 %v1730, %v1919
      %v1921 = vpop.f32.mrb[0].mxu0
      %v1922 = vadd.f32 %v1726, %v1921
      %v1923 = vpop.f32.mrb[0].mxu0
      %v1924 = vadd.f32 %v1730, %v1923
      %1925 = vmatprep.mubr.bf16.mxu0 0
      %1926 = vmatmul.mubr.bf16.gmra.mrb[0].mxu0 %v1698
      %v1927 = vpop.f32.mrb[0].mxu0
      %v1928 = vadd.f32 %v1726, %v1927
      %v1929 = vpop.f32.mrb[0].mxu0
      %v1930 = vadd.f32 %v1730, %v1929
      %v1931 = vpop.f32.mrb[0].mxu0
      %v1932 = vadd.f32 %v1726, %v1931
      %v1933 = vpop.f32.mrb[0].mxu0
      %v1934 = vadd.f32 %v1730, %v1933
      %1935 = vmatprep.mubr.bf16.mxu0 0
      %1936 = vmatmul.mubr.bf16.gmra.mrb[0].mxu0 %v1699
      %v1937 = vpop.f32.mrb[0].mxu0
      %v1938 = vadd.f32 %v1726, %v1937
      %v1939 = vpop.f32.mrb[0].mxu0
      %v1940 = vadd.f32 %v1730, %v1939
      %v1941 = vpop.f32.mrb[0].mxu0
      %v1942 = vadd.f32 %v1726, %v1941
      %v1943 = vpop.f32.mrb[0].mxu0
      %v1944 = vadd.f32 %v1730, %v1943
      %1945 = vmatprep.mubr.bf16.mxu0 0
      %1946 = vmatmul.mubr.bf16.gmra.mrb[0].mxu0 %v1700
      %v1947 = vpop.f32.mrb[0].mxu0
      %v1948 = vadd.f32 %v1726, %v1947
      %v1949 = vpop.f32.mrb[0].mxu0
      %v1950 = vadd.f32 %v1730, %v1949
      %v1951 = vpop.f32.mrb[0].mxu0
      %v1952 = vadd.f32 %v1726, %v1951
      %v1953 = vpop.f32.mrb[0].mxu0
      %v1954 = vadd.f32 %v1730, %v1953
      %1955 = vmatprep.mubr.bf16.mxu0 0
      %1956 = vmatmul.mubr.bf16.gmra.mrb[0].mxu0 %v1701
      %v1957 = vpop.f32.mrb[0].mxu0
      %v1958 = vadd.f32 %v1726, %v1957
      %v1959 = vpop.f32.mrb[0].mxu0
      %v1960 = vadd.f32 %v1730, %v1959
      %v1961 = vpop.f32.mrb[0].mxu0
      %v1962 = vadd.f32 %v1726, %v1961
      %v1963 = vpop.f32.mrb[0].mxu0
      %v1964 = vadd.f32 %v1730, %v1963
      %1965 = vmatprep.mubr.bf16.mxu0 0
      %1966 = vmatmul.mubr.bf16.gmra.mrb[0].mxu0 %v1702
      %v1967 = vpop.f32.mrb[0].mxu0
      %v1968 = vadd.f32 %v1726, %v1967
      %v1969 = vpop.f32.mrb[0].mxu0
      %v1970 = vadd.f32 %v1730, %v1969
      %v1971 = vpop.f32.mrb[0].mxu0
      %v1972 = vadd.f32 %v1726, %v1971
      %v1973 = vpop.f32.mrb[0].mxu0
      %v1974 = vadd.f32 %v1730, %v1973
      %1975 = vmatprep.mubr.bf16.mxu0 0
      %1976 = vmatmul.mubr.bf16.gmra.mrb[0].mxu0 %v1703
      %v1977 = vpop.f32.mrb[0].mxu0
      %v1978 = vadd.f32 %v1726, %v1977
      %v1979 = vpop.f32.mrb[0].mxu0
      %v1980 = vadd.f32 %v1730, %v1979
      %v1981 = vpop.f32.mrb[0].mxu0
      %v1982 = vadd.f32 %v1726, %v1981
      %v1983 = vpop.f32.mrb[0].mxu0
      %v1984 = vadd.f32 %v1730, %v1983
      %1985 = vmatprep.mubr.bf16.mxu0 0
      %1986 = vmatmul.mubr.bf16.gmra.mrb[0].mxu0 %v1704
      %v1987 = vpop.f32.mrb[0].mxu0
      %v1988 = vadd.f32 %v1726, %v1987
      %v1989 = vpop.f32.mrb[0].mxu0
      %v1990 = vadd.f32 %v1730, %v1989
      %v1991 = vpop.f32.mrb[0].mxu0
      %v1992 = vadd.f32 %v1726, %v1991
      %v1993 = vpop.f32.mrb[0].mxu0
      %v1994 = vadd.f32 %v1730, %v1993
      %1995 = vmatprep.mubr.bf16.mxu0 0
      %1996 = vmatmul.mubr.bf16.gmra.mrb[0].mxu0 %v1705
      %v1997 = vpop.f32.mrb[0].mxu0
      %v1998 = vadd.f32 %v1726, %v1997
      %v1999 = vpop.f32.mrb[0].mxu0
      %v2000 = vadd.f32 %v1730, %v1999
      %v2001 = vpop.f32.mrb[0].mxu0
      %v2002 = vadd.f32 %v1726, %v2001
      %v2003 = vpop.f32.mrb[0].mxu0
      %v2004 = vadd.f32 %v1730, %v2003
      %2005 = vmatprep.mubr.bf16.mxu0 0
      %2006 = vmatmul.mubr.bf16.gmra.mrb[0].mxu0 %v1706
      %v2007 = vpop.f32.mrb[0].mxu0
      %v2008 = vadd.f32 %v1726, %v2007
      %v2009 = vpop.f32.mrb[0].mxu0
      %v2010 = vadd.f32 %v1730, %v2009
      %v2011 = vpop.f32.mrb[0].mxu0
      %v2012 = vadd.f32 %v1726, %v2011
      %v2013 = vpop.f32.mrb[0].mxu0
      %v2014 = vadd.f32 %v1730, %v2013
      %2015 = vmatprep.mubr.bf16.mxu0 0
      %2016 = vmatmul.mubr.bf16.gmra.mrb[0].mxu0 %v1707
      %v2017 = vpop.f32.mrb[0].mxu0
      %v2018 = vadd.f32 %v1726, %v2017
      %v2019 = vpop.f32.mrb[0].mxu0
      %v2020 = vadd.f32 %v1730, %v2019
      %v2021 = vpop.f32.mrb[0].mxu0
      %v2022 = vadd.f32 %v1726, %v2021
      %v2023 = vpop.f32.mrb[0].mxu0
      %v2024 = vadd.f32 %v1730, %v2023
      %2025 = vmatprep.mubr.bf16.mxu0 0
      %2026 = vmatmul.mubr.bf16.gmra.mrb[0].mxu0 %v1708
      %v2027 = vpop.f32.mrb[0].mxu0
      %v2028 = vadd.f32 %v1726, %v2027
      %v2029 = vpop.f32.mrb[0].mxu0
      %v2030 = vadd.f32 %v1730, %v2029
      %v2031 = vpop.f32.mrb[0].mxu0
      %v2032 = vadd.f32 %v1726, %v2031
      %v2033 = vpop.f32.mrb[0].mxu0
      %v2034 = vadd.f32 %v1730, %v2033
      %2035 = vmatprep.mubr.bf16.mxu0 0
      %2036 = vmatmul.mubr.bf16.gmra.mrb[0].mxu0 %v1709
      %v2037 = vpop.f32.mrb[0].mxu0
      %v2038 = vadd.f32 %v1726, %v2037
      %v2039 = vpop.f32.mrb[0].mxu0
      %v2040 = vadd.f32 %v1730, %v2039
      %v2041 = vpop.f32.mrb[0].mxu0
      %v2042 = vadd.f32 %v1726, %v2041
      %v2043 = vpop.f32.mrb[0].mxu0
      %v2044 = vadd.f32 %v1730, %v2043
      %2045 = vmatprep.mubr.bf16.mxu0 0
      %2046 = vmatmul.mubr.bf16.gmra.mrb[0].mxu0 %v1710
      %v2047 = vpop.f32.mrb[0].mxu0
      %v2048 = vadd.f32 %v1726, %v2047
      %v2049 = vpop.f32.mrb[0].mxu0
      %v2050 = vadd.f32 %v1730, %v2049
      %v2051 = vpop.f32.mrb[0].mxu0
      %v2052 = vadd.f32 %v1726, %v2051
      %v2053 = vpop.f32.mrb[0].mxu0
      %v2054 = vadd.f32 %v1730, %v2053
      %2055 = vmatprep.mubr.bf16.mxu0 0
      %2056 = vmatmul.mubr.bf16.gmra.mrb[0].mxu0 %v1711
      %v2057 = vpop.f32.mrb[0].mxu0
      %v2058 = vadd.f32 %v1726, %v2057
      %v2059 = vpop.f32.mrb[0].mxu0
      %v2060 = vadd.f32 %v1730, %v2059
      %v2061 = vpop.f32.mrb[0].mxu0
      %v2062 = vadd.f32 %v1726, %v2061
      %v2063 = vpop.f32.mrb[0].mxu0
      %v2064 = vadd.f32 %v1730, %v2063
      %2065 = vmatprep.mubr.bf16.mxu0 0
      %2066 = vmatmul.mubr.bf16.gmra.mrb[0].mxu0 %v1712
      %v2067 = vpop.f32.mrb[0].mxu0
      %v2068 = vadd.f32 %v1726, %v2067
      %v2069 = vpop.f32.mrb[0].mxu0
      %v2070 = vadd.f32 %v1730, %v2069
      %v2071 = vpop.f32.mrb[0].mxu0
      %v2072 = vadd.f32 %v1726, %v2071
      %v2073 = vpop.f32.mrb[0].mxu0
      %v2074 = vadd.f32 %v1730, %v2073
      %2075 = vmatprep.mubr.bf16.mxu0 0
      %2076 = vmatmul.mubr.bf16.gmra.mrb[0].mxu0 %v1713
      %v2077 = vpop.f32.mrb[0].mxu0
      %v2078 = vadd.f32 %v1726, %v2077
      %v2079 = vpop.f32.mrb[0].mxu0
      %v2080 = vadd.f32 %v1730, %v2079
      %v2081 = vpop.f32.mrb[0].mxu0
      %v2082 = vadd.f32 %v1726, %v2081
      %v2083 = vpop.f32.mrb[0].mxu0
      %v2084 = vadd.f32 %v1730, %v2083
      %2085 = vmatprep.mubr.bf16.mxu0 0
      %2086 = vmatmul.mubr.bf16.gmra.mrb[0].mxu0 %v1714
      %v2087 = vpop.f32.mrb[0].mxu0
      %v2088 = vadd.f32 %v1726, %v2087
      %v2089 = vpop.f32.mrb[0].mxu0
      %v2090 = vadd.f32 %v1730, %v2089
      %v2091 = vpop.f32.mrb[0].mxu0
      %v2092 = vadd.f32 %v1726, %v2091
      %v2093 = vpop.f32.mrb[0].mxu0
      %v2094 = vadd.f32 %v1730, %v2093
      %2095 = vmatprep.mubr.bf16.mxu0 0
      %2096 = vmatmul.mubr.bf16.gmra.mrb[0].mxu0 %v1715
      %v2097 = vpop.f32.mrb[0].mxu0
      %v2098 = vadd.f32 %v1726, %v2097
      %v2099 = vpop.f32.mrb[0].mxu0
      %v2100 = vadd.f32 %v1730, %v2099
      %v2101 = vpop.f32.mrb[0].mxu0
      %v2102 = vadd.f32 %v1726, %v2101
      %v2103 = vpop.f32.mrb[0].mxu0
      %v2104 = vadd.f32 %v1730, %v2103
      %2105 = vmatprep.mubr.bf16.mxu0 0
      %2106 = vmatmul.mubr.bf16.gmra.mrb[0].mxu0 %v1716
      %v2107 = vpop.f32.mrb[0].mxu0
      %v2108 = vadd.f32 %v1726, %v2107
      %v2109 = vpop.f32.mrb[0].mxu0
      %v2110 = vadd.f32 %v1730, %v2109
      %v2111 = vpop.f32.mrb[0].mxu0
      %v2112 = vadd.f32 %v1726, %v2111
      %v2113 = vpop.f32.mrb[0].mxu0
      %v2114 = vadd.f32 %v1730, %v2113
      %2115 = vmatprep.mubr.bf16.mxu0 0
      %2116 = vmatmul.mubr.bf16.gmra.mrb[0].mxu0 %v1717
      %v2117 = vpop.f32.mrb[0].mxu0
      %v2118 = vadd.f32 %v1726, %v2117
      %v2119 = vpop.f32.mrb[0].mxu0
      %v2120 = vadd.f32 %v1730, %v2119
      %v2121 = vpop.f32.mrb[0].mxu0
      %v2122 = vadd.f32 %v1726, %v2121
      %v2123 = vpop.f32.mrb[0].mxu0
      %v2124 = vadd.f32 %v1730, %v2123
      %2125 = vmatprep.mubr.bf16.mxu0 0
      %2126 = vmatmul.mubr.bf16.gmra.mrb[0].mxu0 %v1718
      %v2127 = vpop.f32.mrb[0].mxu0
      %v2128 = vadd.f32 %v1726, %v2127
      %v2129 = vpop.f32.mrb[0].mxu0
      %v2130 = vadd.f32 %v1730, %v2129
      %v2131 = vpop.f32.mrb[0].mxu0
      %v2132 = vadd.f32 %v1726, %v2131
      %v2133 = vpop.f32.mrb[0].mxu0
      %v2134 = vadd.f32 %v1730, %v2133
      %2135 = vmatprep.mubr.bf16.mxu0 0
      %2136 = vmatmul.mubr.bf16.gmra.mrb[0].mxu0 %v1719
      %v2137 = vpop.f32.mrb[0].mxu0
      %v2138 = vadd.f32 %v1726, %v2137
      %v2139 = vpop.f32.mrb[0].mxu0
      %v2140 = vadd.f32 %v1730, %v2139
      %v2141 = vpop.f32.mrb[0].mxu0
      %v2142 = vadd.f32 %v1726, %v2141
      %v2143 = vpop.f32.mrb[0].mxu0
      %v2144 = vadd.f32 %v1730, %v2143
      %2145 = vmatprep.mubr.bf16.mxu0 0
      %2146 = vmatmul.mubr.bf16.gmra.mrb[0].mxu0 %v1720
      %v2147 = vpop.f32.mrb[0].mxu0
      %v2148 = vadd.f32 %v1726, %v2147
      %v2149 = vpop.f32.mrb[0].mxu0
      %v2150 = vadd.f32 %v1730, %v2149
      %v2151 = vpop.f32.mrb[0].mxu0
      %v2152 = vadd.f32 %v1726, %v2151
      %v2153 = vpop.f32.mrb[0].mxu0
      %v2154 = vadd.f32 %v1730, %v2153
      %2155 = vmatprep.mubr.bf16.mxu0 0
      %2156 = vmatmul.mubr.bf16.gmra.mrb[0].mxu0 %v1721
      %v2157 = vpop.f32.mrb[0].mxu0
      %v2158 = vadd.f32 %v1726, %v2157
      %v2159 = vpop.f32.mrb[0].mxu0
      %v2160 = vadd.f32 %v1730, %v2159
      %v2161 = vpop.f32.mrb[0].mxu0
      %v2162 = vadd.f32 %v1726, %v2161
      %v2163 = vpop.f32.mrb[0].mxu0
      %v2164 = vadd.f32 %v1730, %v2163
      %2165 = vdwg.mxu0
      %v2166 = vmax.f32 %v1848, 0.0
      %v2167 = vmax.f32 %v1850, 0.0
      %v2168 = vmax.f32 %v1852, 0.0
      %v2169 = vmax.f32 %v1854, 0.0
      %v2170 = vmax.f32 %v1858, 0.0
      %v2171 = vmax.f32 %v1860, 0.0
      %v2172 = vmax.f32 %v1862, 0.0
      %v2173 = vmax.f32 %v1864, 0.0
      %v2174 = vmax.f32 %v1868, 0.0
      %v2175 = vmax.f32 %v1870, 0.0
      %v2176 = vmax.f32 %v1872, 0.0
      %v2177 = vmax.f32 %v1874, 0.0
      %v2178 = vmax.f32 %v1878, 0.0
      %v2179 = vmax.f32 %v1880, 0.0
      %v2180 = vmax.f32 %v1882, 0.0
      %v2181 = vmax.f32 %v1884, 0.0
      %v2182 = vmax.f32 %v1888, 0.0
      %v2183 = vmax.f32 %v1890, 0.0
      %v2184 = vmax.f32 %v1892, 0.0
      %v2185 = vmax.f32 %v1894, 0.0
      %v2186 = vmax.f32 %v1898, 0.0
      %v2187 = vmax.f32 %v1900, 0.0
      %v2188 = vmax.f32 %v1902, 0.0
      %v2189 = vmax.f32 %v1904, 0.0
      %v2190 = vmax.f32 %v1908, 0.0
      %v2191 = vmax.f32 %v1910, 0.0
      %v2192 = vmax.f32 %v1912, 0.0
      %v2193 = vmax.f32 %v1914, 0.0
      %v2194 = vmax.f32 %v1918, 0.0
      %v2195 = vmax.f32 %v1920, 0.0
      %v2196 = vmax.f32 %v1922, 0.0
      %v2197 = vmax.f32 %v1924, 0.0
      %v2198 = vmax.f32 %v1928, 0.0
      %v2199 = vmax.f32 %v1930, 0.0
      %v2200 = vmax.f32 %v1932, 0.0
      %v2201 = vmax.f32 %v1934, 0.0
      %v2202 = vmax.f32 %v1938, 0.0
      %v2203 = vmax.f32 %v1940, 0.0
      %v2204 = vmax.f32 %v1942, 0.0
      %v2205 = vmax.f32 %v1944, 0.0
      %v2206 = vmax.f32 %v1948, 0.0
      %v2207 = vmax.f32 %v1950, 0.0
      %v2208 = vmax.f32 %v1952, 0.0
      %v2209 = vmax.f32 %v1954, 0.0
      %v2210 = vmax.f32 %v1958, 0.0
      %v2211 = vmax.f32 %v1960, 0.0
      %v2212 = vmax.f32 %v1962, 0.0
      %v2213 = vmax.f32 %v1964, 0.0
      %v2214 = vmax.f32 %v1968, 0.0
      %v2215 = vmax.f32 %v1970, 0.0
      %v2216 = vmax.f32 %v1972, 0.0
      %v2217 = vmax.f32 %v1974, 0.0
      %v2218 = vmax.f32 %v1978, 0.0
      %v2219 = vmax.f32 %v1980, 0.0
      %v2220 = vmax.f32 %v1982, 0.0
      %v2221 = vmax.f32 %v1984, 0.0
      %v2222 = vmax.f32 %v1988, 0.0
      %v2223 = vmax.f32 %v1990, 0.0
      %v2224 = vmax.f32 %v1992, 0.0
      %v2225 = vmax.f32 %v1994, 0.0
      %v2226 = vmax.f32 %v1998, 0.0
      %v2227 = vmax.f32 %v2000, 0.0
      %v2228 = vmax.f32 %v2002, 0.0
      %v2229 = vmax.f32 %v2004, 0.0
      %v2230 = vmax.f32 %v2008, 0.0
      %v2231 = vmax.f32 %v2010, 0.0
      %v2232 = vmax.f32 %v2012, 0.0
      %v2233 = vmax.f32 %v2014, 0.0
      %v2234 = vmax.f32 %v2018, 0.0
      %v2235 = vmax.f32 %v2020, 0.0
      %v2236 = vmax.f32 %v2022, 0.0
      %v2237 = vmax.f32 %v2024, 0.0
      %v2238 = vmax.f32 %v2028, 0.0
      %v2239 = vmax.f32 %v2030, 0.0
      %v2240 = vmax.f32 %v2032, 0.0
      %v2241 = vmax.f32 %v2034, 0.0
      %v2242 = vmax.f32 %v2038, 0.0
      %v2243 = vmax.f32 %v2040, 0.0
      %v2244 = vmax.f32 %v2042, 0.0
      %v2245 = vmax.f32 %v2044, 0.0
      %v2246 = vmax.f32 %v2048, 0.0
      %v2247 = vmax.f32 %v2050, 0.0
      %v2248 = vmax.f32 %v2052, 0.0
      %v2249 = vmax.f32 %v2054, 0.0
      %v2250 = vmax.f32 %v2058, 0.0
      %v2251 = vmax.f32 %v2060, 0.0
      %v2252 = vmax.f32 %v2062, 0.0
      %v2253 = vmax.f32 %v2064, 0.0
      %v2254 = vmax.f32 %v2068, 0.0
      %v2255 = vmax.f32 %v2070, 0.0
      %v2256 = vmax.f32 %v2072, 0.0
      %v2257 = vmax.f32 %v2074, 0.0
      %v2258 = vmax.f32 %v2078, 0.0
      %v2259 = vmax.f32 %v2080, 0.0
      %v2260 = vmax.f32 %v2082, 0.0
      %v2261 = vmax.f32 %v2084, 0.0
      %v2262 = vmax.f32 %v2088, 0.0
      %v2263 = vmax.f32 %v2090, 0.0
      %v2264 = vmax.f32 %v2092, 0.0
      %v2265 = vmax.f32 %v2094, 0.0
      %v2266 = vmax.f32 %v2098, 0.0
      %v2267 = vmax.f32 %v2100, 0.0
      %v2268 = vmax.f32 %v2102, 0.0
      %v2269 = vmax.f32 %v2104, 0.0
      %v2270 = vmax.f32 %v2108, 0.0
      %v2271 = vmax.f32 %v2110, 0.0
      %v2272 = vmax.f32 %v2112, 0.0
      %v2273 = vmax.f32 %v2114, 0.0
      %v2274 = vmax.f32 %v2118, 0.0
      %v2275 = vmax.f32 %v2120, 0.0
      %v2276 = vmax.f32 %v2122, 0.0
      %v2277 = vmax.f32 %v2124, 0.0
      %v2278 = vmax.f32 %v2128, 0.0
      %v2279 = vmax.f32 %v2130, 0.0
      %v2280 = vmax.f32 %v2132, 0.0
      %v2281 = vmax.f32 %v2134, 0.0
      %v2282 = vmax.f32 %v2138, 0.0
      %v2283 = vmax.f32 %v2140, 0.0
      %v2284 = vmax.f32 %v2142, 0.0
      %v2285 = vmax.f32 %v2144, 0.0
      %v2286 = vmax.f32 %v2148, 0.0
      %v2287 = vmax.f32 %v2150, 0.0
      %v2288 = vmax.f32 %v2152, 0.0
      %v2289 = vmax.f32 %v2154, 0.0
      %v2290 = vmax.f32 %v2158, 0.0
      %v2291 = vmax.f32 %v2160, 0.0
      %v2292 = vmax.f32 %v2162, 0.0
      %v2293 = vmax.f32 %v2164, 0.0
      %2358 = vrot.lane.b32.xlu0 %v2166, 64
      %v2359 = vpop.permute.xlu0 %2358
      %2360 = vrot.lane.b32.xlu0 %v2168, 64
      %v2361 = vpop.permute.xlu0 %2360
      %2362 = vrot.lane.b32.xlu0 %v2170, 64
      %v2363 = vpop.permute.xlu0 %2362
      %2364 = vrot.lane.b32.xlu0 %v2172, 64
      %v2365 = vpop.permute.xlu0 %2364
      %2366 = vrot.lane.b32.xlu0 %v2174, 64
      %v2367 = vpop.permute.xlu0 %2366
      %2368 = vrot.lane.b32.xlu0 %v2176, 64
      %v2369 = vpop.permute.xlu0 %2368
      %2370 = vrot.lane.b32.xlu0 %v2178, 64
      %v2371 = vpop.permute.xlu0 %2370
      %2372 = vrot.lane.b32.xlu0 %v2180, 64
      %v2373 = vpop.permute.xlu0 %2372
      %2374 = vrot.lane.b32.xlu0 %v2182, 64
      %v2375 = vpop.permute.xlu0 %2374
      %2376 = vrot.lane.b32.xlu0 %v2184, 64
      %v2377 = vpop.permute.xlu0 %2376
      %2378 = vrot.lane.b32.xlu0 %v2186, 64
      %v2379 = vpop.permute.xlu0 %2378
      %2380 = vrot.lane.b32.xlu0 %v2188, 64
      %v2381 = vpop.permute.xlu0 %2380
      %2382 = vrot.lane.b32.xlu0 %v2190, 64
      %v2383 = vpop.permute.xlu0 %2382
      %2384 = vrot.lane.b32.xlu0 %v2192, 64
      %v2385 = vpop.permute.xlu0 %2384
      %2386 = vrot.lane.b32.xlu0 %v2194, 64
      %v2387 = vpop.permute.xlu0 %2386
      %2388 = vrot.lane.b32.xlu0 %v2196, 64
      %v2389 = vpop.permute.xlu0 %2388
      %2390 = vrot.lane.b32.xlu0 %v2198, 64
      %v2391 = vpop.permute.xlu0 %2390
      %2392 = vrot.lane.b32.xlu0 %v2200, 64
      %v2393 = vpop.permute.xlu0 %2392
      %2394 = vrot.lane.b32.xlu0 %v2202, 64
      %v2395 = vpop.permute.xlu0 %2394
      %2396 = vrot.lane.b32.xlu0 %v2204, 64
      %v2397 = vpop.permute.xlu0 %2396
      %2398 = vrot.lane.b32.xlu0 %v2206, 64
      %v2399 = vpop.permute.xlu0 %2398
      %2400 = vrot.lane.b32.xlu0 %v2208, 64
      %v2401 = vpop.permute.xlu0 %2400
      %2402 = vrot.lane.b32.xlu0 %v2210, 64
      %v2403 = vpop.permute.xlu0 %2402
      %2404 = vrot.lane.b32.xlu0 %v2212, 64
      %v2405 = vpop.permute.xlu0 %2404
      %2406 = vrot.lane.b32.xlu0 %v2214, 64
      %v2407 = vpop.permute.xlu0 %2406
      %2408 = vrot.lane.b32.xlu0 %v2216, 64
      %v2409 = vpop.permute.xlu0 %2408
      %2410 = vrot.lane.b32.xlu0 %v2218, 64
      %v2411 = vpop.permute.xlu0 %2410
      %2412 = vrot.lane.b32.xlu0 %v2220, 64
      %v2413 = vpop.permute.xlu0 %2412
      %2414 = vrot.lane.b32.xlu0 %v2222, 64
      %v2415 = vpop.permute.xlu0 %2414
      %2416 = vrot.lane.b32.xlu0 %v2224, 64
      %v2417 = vpop.permute.xlu0 %2416
      %2418 = vrot.lane.b32.xlu0 %v2226, 64
      %v2419 = vpop.permute.xlu0 %2418
      %2420 = vrot.lane.b32.xlu0 %v2228, 64
      %v2421 = vpop.permute.xlu0 %2420
      %2422 = vrot.lane.b32.xlu0 %v2230, 64
      %v2423 = vpop.permute.xlu0 %2422
      %2424 = vrot.lane.b32.xlu0 %v2232, 64
      %v2425 = vpop.permute.xlu0 %2424
      %2426 = vrot.lane.b32.xlu0 %v2234, 64
      %v2427 = vpop.permute.xlu0 %2426
      %2428 = vrot.lane.b32.xlu0 %v2236, 64
      %v2429 = vpop.permute.xlu0 %2428
      %2430 = vrot.lane.b32.xlu0 %v2238, 64
      %v2431 = vpop.permute.xlu0 %2430
      %2432 = vrot.lane.b32.xlu0 %v2240, 64
      %v2433 = vpop.permute.xlu0 %2432
      %2434 = vrot.lane.b32.xlu0 %v2242, 64
      %v2435 = vpop.permute.xlu0 %2434
      %2436 = vrot.lane.b32.xlu0 %v2244, 64
      %v2437 = vpop.permute.xlu0 %2436
      %2438 = vrot.lane.b32.xlu0 %v2246, 64
      %v2439 = vpop.permute.xlu0 %2438
      %2440 = vrot.lane.b32.xlu0 %v2248, 64
      %v2441 = vpop.permute.xlu0 %2440
      %2442 = vrot.lane.b32.xlu0 %v2250, 64
      %v2443 = vpop.permute.xlu0 %2442
      %2444 = vrot.lane.b32.xlu0 %v2252, 64
      %v2445 = vpop.permute.xlu0 %2444
      %2446 = vrot.lane.b32.xlu0 %v2254, 64
      %v2447 = vpop.permute.xlu0 %2446
      %2448 = vrot.lane.b32.xlu0 %v2256, 64
      %v2449 = vpop.permute.xlu0 %2448
      %2450 = vrot.lane.b32.xlu0 %v2258, 64
      %v2451 = vpop.permute.xlu0 %2450
      %2452 = vrot.lane.b32.xlu0 %v2260, 64
      %v2453 = vpop.permute.xlu0 %2452
      %2454 = vrot.lane.b32.xlu0 %v2262, 64
      %v2455 = vpop.permute.xlu0 %2454
      %2456 = vrot.lane.b32.xlu0 %v2264, 64
      %v2457 = vpop.permute.xlu0 %2456
      %2458 = vrot.lane.b32.xlu0 %v2266, 64
      %v2459 = vpop.permute.xlu0 %2458
      %2460 = vrot.lane.b32.xlu0 %v2268, 64
      %v2461 = vpop.permute.xlu0 %2460
      %2462 = vrot.lane.b32.xlu0 %v2270, 64
      %v2463 = vpop.permute.xlu0 %2462
      %2464 = vrot.lane.b32.xlu0 %v2272, 64
      %v2465 = vpop.permute.xlu0 %2464
      %2466 = vrot.lane.b32.xlu0 %v2274, 64
      %v2467 = vpop.permute.xlu0 %2466
      %2468 = vrot.lane.b32.xlu0 %v2276, 64
      %v2469 = vpop.permute.xlu0 %2468
      %2470 = vrot.lane.b32.xlu0 %v2278, 64
      %v2471 = vpop.permute.xlu0 %2470
      %2472 = vrot.lane.b32.xlu0 %v2280, 64
      %v2473 = vpop.permute.xlu0 %2472
      %2474 = vrot.lane.b32.xlu0 %v2282, 64
      %v2475 = vpop.permute.xlu0 %2474
      %2476 = vrot.lane.b32.xlu0 %v2284, 64
      %v2477 = vpop.permute.xlu0 %2476
      %2478 = vrot.lane.b32.xlu0 %v2286, 64
      %v2479 = vpop.permute.xlu0 %2478
      %2480 = vrot.lane.b32.xlu0 %v2288, 64
      %v2481 = vpop.permute.xlu0 %2480
      %2482 = vrot.lane.b32.xlu0 %v2290, 64
      %v2483 = vpop.permute.xlu0 %2482
      %2484 = vrot.lane.b32.xlu0 %v2292, 64
      %v2485 = vpop.permute.xlu0 %2484
      %v2550 = vmax.f32 %v2166, %v2359
      %v2551 = vmax.f32 %v2168, %v2361
      %v2552 = vmax.f32 %v2170, %v2363
      %v2553 = vmax.f32 %v2172, %v2365
      %v2554 = vmax.f32 %v2174, %v2367
      %v2555 = vmax.f32 %v2176, %v2369
      %v2556 = vmax.f32 %v2178, %v2371
      %v2557 = vmax.f32 %v2180, %v2373
      %v2558 = vmax.f32 %v2182, %v2375
      %v2559 = vmax.f32 %v2184, %v2377
      %v2560 = vmax.f32 %v2186, %v2379
      %v2561 = vmax.f32 %v2188, %v2381
      %v2562 = vmax.f32 %v2190, %v2383
      %v2563 = vmax.f32 %v2192, %v2385
      %v2564 = vmax.f32 %v2194, %v2387
      %v2565 = vmax.f32 %v2196, %v2389
      %v2566 = vmax.f32 %v2198, %v2391
      %v2567 = vmax.f32 %v2200, %v2393
      %v2568 = vmax.f32 %v2202, %v2395
      %v2569 = vmax.f32 %v2204, %v2397
      %v2570 = vmax.f32 %v2206, %v2399
      %v2571 = vmax.f32 %v2208, %v2401
      %v2572 = vmax.f32 %v2210, %v2403
      %v2573 = vmax.f32 %v2212, %v2405
      %v2574 = vmax.f32 %v2214, %v2407
      %v2575 = vmax.f32 %v2216, %v2409
      %v2576 = vmax.f32 %v2218, %v2411
      %v2577 = vmax.f32 %v2220, %v2413
      %v2578 = vmax.f32 %v2222, %v2415
      %v2579 = vmax.f32 %v2224, %v2417
      %v2580 = vmax.f32 %v2226, %v2419
      %v2581 = vmax.f32 %v2228, %v2421
      %v2582 = vmax.f32 %v2230, %v2423
      %v2583 = vmax.f32 %v2232, %v2425
      %v2584 = vmax.f32 %v2234, %v2427
      %v2585 = vmax.f32 %v2236, %v2429
      %v2586 = vmax.f32 %v2238, %v2431
      %v2587 = vmax.f32 %v2240, %v2433
      %v2588 = vmax.f32 %v2242, %v2435
      %v2589 = vmax.f32 %v2244, %v2437
      %v2590 = vmax.f32 %v2246, %v2439
      %v2591 = vmax.f32 %v2248, %v2441
      %v2592 = vmax.f32 %v2250, %v2443
      %v2593 = vmax.f32 %v2252, %v2445
      %v2594 = vmax.f32 %v2254, %v2447
      %v2595 = vmax.f32 %v2256, %v2449
      %v2596 = vmax.f32 %v2258, %v2451
      %v2597 = vmax.f32 %v2260, %v2453
      %v2598 = vmax.f32 %v2262, %v2455
      %v2599 = vmax.f32 %v2264, %v2457
      %v2600 = vmax.f32 %v2266, %v2459
      %v2601 = vmax.f32 %v2268, %v2461
      %v2602 = vmax.f32 %v2270, %v2463
      %v2603 = vmax.f32 %v2272, %v2465
      %v2604 = vmax.f32 %v2274, %v2467
      %v2605 = vmax.f32 %v2276, %v2469
      %v2606 = vmax.f32 %v2278, %v2471
      %v2607 = vmax.f32 %v2280, %v2473
      %v2608 = vmax.f32 %v2282, %v2475
      %v2609 = vmax.f32 %v2284, %v2477
      %v2610 = vmax.f32 %v2286, %v2479
      %v2611 = vmax.f32 %v2288, %v2481
      %v2612 = vmax.f32 %v2290, %v2483
      %v2613 = vmax.f32 %v2292, %v2485
      %v2614 = vmax.f32 %v2550, %v2167
      %v2615 = vmax.f32 %v2551, %v2169
      %v2616 = vmax.f32 %v2552, %v2171
      %v2617 = vmax.f32 %v2553, %v2173
      %v2618 = vmax.f32 %v2554, %v2175
      %v2619 = vmax.f32 %v2555, %v2177
      %v2620 = vmax.f32 %v2556, %v2179
      %v2621 = vmax.f32 %v2557, %v2181
      %v2622 = vmax.f32 %v2558, %v2183
      %v2623 = vmax.f32 %v2559, %v2185
      %v2624 = vmax.f32 %v2560, %v2187
      %v2625 = vmax.f32 %v2561, %v2189
      %v2626 = vmax.f32 %v2562, %v2191
      %v2627 = vmax.f32 %v2563, %v2193
      %v2628 = vmax.f32 %v2564, %v2195
      %v2629 = vmax.f32 %v2565, %v2197
      %v2630 = vmax.f32 %v2566, %v2199
      %v2631 = vmax.f32 %v2567, %v2201
      %v2632 = vmax.f32 %v2568, %v2203
      %v2633 = vmax.f32 %v2569, %v2205
      %v2634 = vmax.f32 %v2570, %v2207
      %v2635 = vmax.f32 %v2571, %v2209
      %v2636 = vmax.f32 %v2572, %v2211
      %v2637 = vmax.f32 %v2573, %v2213
      %v2638 = vmax.f32 %v2574, %v2215
      %v2639 = vmax.f32 %v2575, %v2217
      %v2640 = vmax.f32 %v2576, %v2219
      %v2641 = vmax.f32 %v2577, %v2221
      %v2642 = vmax.f32 %v2578, %v2223
      %v2643 = vmax.f32 %v2579, %v2225
      %v2644 = vmax.f32 %v2580, %v2227
      %v2645 = vmax.f32 %v2581, %v2229
      %v2646 = vmax.f32 %v2582, %v2231
      %v2647 = vmax.f32 %v2583, %v2233
      %v2648 = vmax.f32 %v2584, %v2235
      %v2649 = vmax.f32 %v2585, %v2237
      %v2650 = vmax.f32 %v2586, %v2239
      %v2651 = vmax.f32 %v2587, %v2241
      %v2652 = vmax.f32 %v2588, %v2243
      %v2653 = vmax.f32 %v2589, %v2245
      %v2654 = vmax.f32 %v2590, %v2247
      %v2655 = vmax.f32 %v2591, %v2249
      %v2656 = vmax.f32 %v2592, %v2251
      %v2657 = vmax.f32 %v2593, %v2253
      %v2658 = vmax.f32 %v2594, %v2255
      %v2659 = vmax.f32 %v2595, %v2257
      %v2660 = vmax.f32 %v2596, %v2259
      %v2661 = vmax.f32 %v2597, %v2261
      %v2662 = vmax.f32 %v2598, %v2263
      %v2663 = vmax.f32 %v2599, %v2265
      %v2664 = vmax.f32 %v2600, %v2267
      %v2665 = vmax.f32 %v2601, %v2269
      %v2666 = vmax.f32 %v2602, %v2271
      %v2667 = vmax.f32 %v2603, %v2273
      %v2668 = vmax.f32 %v2604, %v2275
      %v2669 = vmax.f32 %v2605, %v2277
      %v2670 = vmax.f32 %v2606, %v2279
      %v2671 = vmax.f32 %v2607, %v2281
      %v2672 = vmax.f32 %v2608, %v2283
      %v2673 = vmax.f32 %v2609, %v2285
      %v2674 = vmax.f32 %v2610, %v2287
      %v2675 = vmax.f32 %v2611, %v2289
      %v2676 = vmax.f32 %v2612, %v2291
      %v2677 = vmax.f32 %v2613, %v2293
      %2742 = vrot.lane.b32.xlu0 %v2167, 64
      %v2743 = vpop.permute.xlu0 %2742
      %2744 = vrot.lane.b32.xlu0 %v2169, 64
      %v2745 = vpop.permute.xlu0 %2744
      %2746 = vrot.lane.b32.xlu0 %v2171, 64
      %v2747 = vpop.permute.xlu0 %2746
      %2748 = vrot.lane.b32.xlu0 %v2173, 64
      %v2749 = vpop.permute.xlu0 %2748
      %2750 = vrot.lane.b32.xlu0 %v2175, 64
      %v2751 = vpop.permute.xlu0 %2750
      %2752 = vrot.lane.b32.xlu0 %v2177, 64
      %v2753 = vpop.permute.xlu0 %2752
      %2754 = vrot.lane.b32.xlu0 %v2179, 64
      %v2755 = vpop.permute.xlu0 %2754
      %2756 = vrot.lane.b32.xlu0 %v2181, 64
      %v2757 = vpop.permute.xlu0 %2756
      %2758 = vrot.lane.b32.xlu0 %v2183, 64
      %v2759 = vpop.permute.xlu0 %2758
      %2760 = vrot.lane.b32.xlu0 %v2185, 64
      %v2761 = vpop.permute.xlu0 %2760
      %2762 = vrot.lane.b32.xlu0 %v2187, 64
      %v2763 = vpop.permute.xlu0 %2762
      %2764 = vrot.lane.b32.xlu0 %v2189, 64
      %v2765 = vpop.permute.xlu0 %2764
      %2766 = vrot.lane.b32.xlu0 %v2191, 64
      %v2767 = vpop.permute.xlu0 %2766
      %2768 = vrot.lane.b32.xlu0 %v2193, 64
      %v2769 = vpop.permute.xlu0 %2768
      %2770 = vrot.lane.b32.xlu0 %v2195, 64
      %v2771 = vpop.permute.xlu0 %2770
      %2772 = vrot.lane.b32.xlu0 %v2197, 64
      %v2773 = vpop.permute.xlu0 %2772
      %2774 = vrot.lane.b32.xlu0 %v2199, 64
      %v2775 = vpop.permute.xlu0 %2774
      %2776 = vrot.lane.b32.xlu0 %v2201, 64
      %v2777 = vpop.permute.xlu0 %2776
      %2778 = vrot.lane.b32.xlu0 %v2203, 64
      %v2779 = vpop.permute.xlu0 %2778
      %2780 = vrot.lane.b32.xlu0 %v2205, 64
      %v2781 = vpop.permute.xlu0 %2780
      %2782 = vrot.lane.b32.xlu0 %v2207, 64
      %v2783 = vpop.permute.xlu0 %2782
      %2784 = vrot.lane.b32.xlu0 %v2209, 64
      %v2785 = vpop.permute.xlu0 %2784
      %2786 = vrot.lane.b32.xlu0 %v2211, 64
      %v2787 = vpop.permute.xlu0 %2786
      %2788 = vrot.lane.b32.xlu0 %v2213, 64
      %v2789 = vpop.permute.xlu0 %2788
      %2790 = vrot.lane.b32.xlu0 %v2215, 64
      %v2791 = vpop.permute.xlu0 %2790
      %2792 = vrot.lane.b32.xlu0 %v2217, 64
      %v2793 = vpop.permute.xlu0 %2792
      %2794 = vrot.lane.b32.xlu0 %v2219, 64
      %v2795 = vpop.permute.xlu0 %2794
      %2796 = vrot.lane.b32.xlu0 %v2221, 64
      %v2797 = vpop.permute.xlu0 %2796
      %2798 = vrot.lane.b32.xlu0 %v2223, 64
      %v2799 = vpop.permute.xlu0 %2798
      %2800 = vrot.lane.b32.xlu0 %v2225, 64
      %v2801 = vpop.permute.xlu0 %2800
      %2802 = vrot.lane.b32.xlu0 %v2227, 64
      %v2803 = vpop.permute.xlu0 %2802
      %2804 = vrot.lane.b32.xlu0 %v2229, 64
      %v2805 = vpop.permute.xlu0 %2804
      %2806 = vrot.lane.b32.xlu0 %v2231, 64
      %v2807 = vpop.permute.xlu0 %2806
      %2808 = vrot.lane.b32.xlu0 %v2233, 64
      %v2809 = vpop.permute.xlu0 %2808
      %2810 = vrot.lane.b32.xlu0 %v2235, 64
      %v2811 = vpop.permute.xlu0 %2810
      %2812 = vrot.lane.b32.xlu0 %v2237, 64
      %v2813 = vpop.permute.xlu0 %2812
      %2814 = vrot.lane.b32.xlu0 %v2239, 64
      %v2815 = vpop.permute.xlu0 %2814
      %2816 = vrot.lane.b32.xlu0 %v2241, 64
      %v2817 = vpop.permute.xlu0 %2816
      %2818 = vrot.lane.b32.xlu0 %v2243, 64
      %v2819 = vpop.permute.xlu0 %2818
      %2820 = vrot.lane.b32.xlu0 %v2245, 64
      %v2821 = vpop.permute.xlu0 %2820
      %2822 = vrot.lane.b32.xlu0 %v2247, 64
      %v2823 = vpop.permute.xlu0 %2822
      %2824 = vrot.lane.b32.xlu0 %v2249, 64
      %v2825 = vpop.permute.xlu0 %2824
      %2826 = vrot.lane.b32.xlu0 %v2251, 64
      %v2827 = vpop.permute.xlu0 %2826
      %2828 = vrot.lane.b32.xlu0 %v2253, 64
      %v2829 = vpop.permute.xlu0 %2828
      %2830 = vrot.lane.b32.xlu0 %v2255, 64
      %v2831 = vpop.permute.xlu0 %2830
      %2832 = vrot.lane.b32.xlu0 %v2257, 64
      %v2833 = vpop.permute.xlu0 %2832
      %2834 = vrot.lane.b32.xlu0 %v2259, 64
      %v2835 = vpop.permute.xlu0 %2834
      %2836 = vrot.lane.b32.xlu0 %v2261, 64
      %v2837 = vpop.permute.xlu0 %2836
      %2838 = vrot.lane.b32.xlu0 %v2263, 64
      %v2839 = vpop.permute.xlu0 %2838
      %2840 = vrot.lane.b32.xlu0 %v2265, 64
      %v2841 = vpop.permute.xlu0 %2840
      %2842 = vrot.lane.b32.xlu0 %v2267, 64
      %v2843 = vpop.permute.xlu0 %2842
      %2844 = vrot.lane.b32.xlu0 %v2269, 64
      %v2845 = vpop.permute.xlu0 %2844
      %2846 = vrot.lane.b32.xlu0 %v2271, 64
      %v2847 = vpop.permute.xlu0 %2846
      %2848 = vrot.lane.b32.xlu0 %v2273, 64
      %v2849 = vpop.permute.xlu0 %2848
      %2850 = vrot.lane.b32.xlu0 %v2275, 64
      %v2851 = vpop.permute.xlu0 %2850
      %2852 = vrot.lane.b32.xlu0 %v2277, 64
      %v2853 = vpop.permute.xlu0 %2852
      %2854 = vrot.lane.b32.xlu0 %v2279, 64
      %v2855 = vpop.permute.xlu0 %2854
      %2856 = vrot.lane.b32.xlu0 %v2281, 64
      %v2857 = vpop.permute.xlu0 %2856
      %2858 = vrot.lane.b32.xlu0 %v2283, 64
      %v2859 = vpop.permute.xlu0 %2858
      %2860 = vrot.lane.b32.xlu0 %v2285, 64
      %v2861 = vpop.permute.xlu0 %2860
      %2862 = vrot.lane.b32.xlu0 %v2287, 64
      %v2863 = vpop.permute.xlu0 %2862
      %2864 = vrot.lane.b32.xlu0 %v2289, 64
      %v2865 = vpop.permute.xlu0 %2864
      %2866 = vrot.lane.b32.xlu0 %v2291, 64
      %v2867 = vpop.permute.xlu0 %2866
      %2868 = vrot.lane.b32.xlu0 %v2293, 64
      %v2869 = vpop.permute.xlu0 %2868
      %v2934 = vmax.f32 %v2614, %v2743
      %v2935 = vmax.f32 %v2615, %v2745
      %v2936 = vmax.f32 %v2616, %v2747
      %v2937 = vmax.f32 %v2617, %v2749
      %v2938 = vmax.f32 %v2618, %v2751
      %v2939 = vmax.f32 %v2619, %v2753
      %v2940 = vmax.f32 %v2620, %v2755
      %v2941 = vmax.f32 %v2621, %v2757
      %v2942 = vmax.f32 %v2622, %v2759
      %v2943 = vmax.f32 %v2623, %v2761
      %v2944 = vmax.f32 %v2624, %v2763
      %v2945 = vmax.f32 %v2625, %v2765
      %v2946 = vmax.f32 %v2626, %v2767
      %v2947 = vmax.f32 %v2627, %v2769
      %v2948 = vmax.f32 %v2628, %v2771
      %v2949 = vmax.f32 %v2629, %v2773
      %v2950 = vmax.f32 %v2630, %v2775
      %v2951 = vmax.f32 %v2631, %v2777
      %v2952 = vmax.f32 %v2632, %v2779
      %v2953 = vmax.f32 %v2633, %v2781
      %v2954 = vmax.f32 %v2634, %v2783
      %v2955 = vmax.f32 %v2635, %v2785
      %v2956 = vmax.f32 %v2636, %v2787
      %v2957 = vmax.f32 %v2637, %v2789
      %v2958 = vmax.f32 %v2638, %v2791
      %v2959 = vmax.f32 %v2639, %v2793
      %v2960 = vmax.f32 %v2640, %v2795
      %v2961 = vmax.f32 %v2641, %v2797
      %v2962 = vmax.f32 %v2642, %v2799
      %v2963 = vmax.f32 %v2643, %v2801
      %v2964 = vmax.f32 %v2644, %v2803
      %v2965 = vmax.f32 %v2645, %v2805
      %v2966 = vmax.f32 %v2646, %v2807
      %v2967 = vmax.f32 %v2647, %v2809
      %v2968 = vmax.f32 %v2648, %v2811
      %v2969 = vmax.f32 %v2649, %v2813
      %v2970 = vmax.f32 %v2650, %v2815
      %v2971 = vmax.f32 %v2651, %v2817
      %v2972 = vmax.f32 %v2652, %v2819
      %v2973 = vmax.f32 %v2653, %v2821
      %v2974 = vmax.f32 %v2654, %v2823
      %v2975 = vmax.f32 %v2655, %v2825
      %v2976 = vmax.f32 %v2656, %v2827
      %v2977 = vmax.f32 %v2657, %v2829
      %v2978 = vmax.f32 %v2658, %v2831
      %v2979 = vmax.f32 %v2659, %v2833
      %v2980 = vmax.f32 %v2660, %v2835
      %v2981 = vmax.f32 %v2661, %v2837
      %v2982 = vmax.f32 %v2662, %v2839
      %v2983 = vmax.f32 %v2663, %v2841
      %v2984 = vmax.f32 %v2664, %v2843
      %v2985 = vmax.f32 %v2665, %v2845
      %v2986 = vmax.f32 %v2666, %v2847
      %v2987 = vmax.f32 %v2667, %v2849
      %v2988 = vmax.f32 %v2668, %v2851
      %v2989 = vmax.f32 %v2669, %v2853
      %v2990 = vmax.f32 %v2670, %v2855
      %v2991 = vmax.f32 %v2671, %v2857
      %v2992 = vmax.f32 %v2672, %v2859
      %v2993 = vmax.f32 %v2673, %v2861
      %v2994 = vmax.f32 %v2674, %v2863
      %v2995 = vmax.f32 %v2675, %v2865
      %v2996 = vmax.f32 %v2676, %v2867
      %v2997 = vmax.f32 %v2677, %v2869
      %vm2998 = vcmask 523264
      %2999 = vst.msk [vmem:[%s302] sm:$0xff] %vm2998, %v2934
      %3000 = vst.msk [vmem:[%s302 + $0x8] sm:$0xff] %vm2998, %v2935
      %3001 = vst.msk [vmem:[%s302 + $0x10] sm:$0xff] %vm2998, %v2936
      %3002 = vst.msk [vmem:[%s302 + $0x18] sm:$0xff] %vm2998, %v2937
      %3003 = vst.msk [vmem:[%s302 + $0x20] sm:$0xff] %vm2998, %v2938
      %3004 = vst.msk [vmem:[%s302 + $0x28] sm:$0xff] %vm2998, %v2939
      %3005 = vst.msk [vmem:[%s302 + $0x30] sm:$0xff] %vm2998, %v2940
      %3006 = vst.msk [vmem:[%s302 + $0x38] sm:$0xff] %vm2998, %v2941
      %3007 = vst.msk [vmem:[%s302 + $0x40] sm:$0xff] %vm2998, %v2942
      %3008 = vst.msk [vmem:[%s302 + $0x48] sm:$0xff] %vm2998, %v2943
      %3009 = vst.msk [vmem:[%s302 + $0x50] sm:$0xff] %vm2998, %v2944
      %3010 = vst.msk [vmem:[%s302 + $0x58] sm:$0xff] %vm2998, %v2945
      %3011 = vst.msk [vmem:[%s302 + $0x60] sm:$0xff] %vm2998, %v2946
      %3012 = vst.msk [vmem:[%s302 + $0x68] sm:$0xff] %vm2998, %v2947
      %3013 = vst.msk [vmem:[%s302 + $0x70] sm:$0xff] %vm2998, %v2948
      %3014 = vst.msk [vmem:[%s302 + $0x78] sm:$0xff] %vm2998, %v2949
      %3015 = vst.msk [vmem:[%s302 + $0x80] sm:$0xff] %vm2998, %v2950
      %3016 = vst.msk [vmem:[%s302 + $0x88] sm:$0xff] %vm2998, %v2951
      %3017 = vst.msk [vmem:[%s302 + $0x90] sm:$0xff] %vm2998, %v2952
      %3018 = vst.msk [vmem:[%s302 + $0x98] sm:$0xff] %vm2998, %v2953
      %3019 = vst.msk [vmem:[%s302 + $0xa0] sm:$0xff] %vm2998, %v2954
      %3020 = vst.msk [vmem:[%s302 + $0xa8] sm:$0xff] %vm2998, %v2955
      %3021 = vst.msk [vmem:[%s302 + $0xb0] sm:$0xff] %vm2998, %v2956
      %3022 = vst.msk [vmem:[%s302 + $0xb8] sm:$0xff] %vm2998, %v2957
      %3023 = vst.msk [vmem:[%s302 + $0xc0] sm:$0xff] %vm2998, %v2958
      %3024 = vst.msk [vmem:[%s302 + $0xc8] sm:$0xff] %vm2998, %v2959
      %3025 = vst.msk [vmem:[%s302 + $0xd0] sm:$0xff] %vm2998, %v2960
      %3026 = vst.msk [vmem:[%s302 + $0xd8] sm:$0xff] %vm2998, %v2961
      %3027 = vst.msk [vmem:[%s302 + $0xe0] sm:$0xff] %vm2998, %v2962
      %3028 = vst.msk [vmem:[%s302 + $0xe8] sm:$0xff] %vm2998, %v2963
      %3029 = vst.msk [vmem:[%s302 + $0xf0] sm:$0xff] %vm2998, %v2964
      %3030 = vst.msk [vmem:[%s302 + $0xf8] sm:$0xff] %vm2998, %v2965
      %3031 = vst.msk [vmem:[%s302 + $0x100] sm:$0xff] %vm2998, %v2966
      %3032 = vst.msk [vmem:[%s302 + $0x108] sm:$0xff] %vm2998, %v2967
      %3033 = vst.msk [vmem:[%s302 + $0x110] sm:$0xff] %vm2998, %v2968
      %3034 = vst.msk [vmem:[%s302 + $0x118] sm:$0xff] %vm2998, %v2969
      %3035 = vst.msk [vmem:[%s302 + $0x120] sm:$0xff] %vm2998, %v2970
      %3036 = vst.msk [vmem:[%s302 + $0x128] sm:$0xff] %vm2998, %v2971
      %3037 = vst.msk [vmem:[%s302 + $0x130] sm:$0xff] %vm2998, %v2972
      %3038 = vst.msk [vmem:[%s302 + $0x138] sm:$0xff] %vm2998, %v2973
      %3039 = vst.msk [vmem:[%s302 + $0x140] sm:$0xff] %vm2998, %v2974
      %3040 = vst.msk [vmem:[%s302 + $0x148] sm:$0xff] %vm2998, %v2975
      %3041 = vst.msk [vmem:[%s302 + $0x150] sm:$0xff] %vm2998, %v2976
      %3042 = vst.msk [vmem:[%s302 + $0x158] sm:$0xff] %vm2998, %v2977
      %3043 = vst.msk [vmem:[%s302 + $0x160] sm:$0xff] %vm2998, %v2978
      %3044 = vst.msk [vmem:[%s302 + $0x168] sm:$0xff] %vm2998, %v2979
      %3045 = vst.msk [vmem:[%s302 + $0x170] sm:$0xff] %vm2998, %v2980
      %3046 = vst.msk [vmem:[%s302 + $0x178] sm:$0xff] %vm2998, %v2981
      %3047 = vst.msk [vmem:[%s302 + $0x180] sm:$0xff] %vm2998, %v2982
      %3048 = vst.msk [vmem:[%s302 + $0x188] sm:$0xff] %vm2998, %v2983
      %3049 = vst.msk [vmem:[%s302 + $0x190] sm:$0xff] %vm2998, %v2984
      %3050 = vst.msk [vmem:[%s302 + $0x198] sm:$0xff] %vm2998, %v2985
      %3051 = vst.msk [vmem:[%s302 + $0x1a0] sm:$0xff] %vm2998, %v2986
      %3052 = vst.msk [vmem:[%s302 + $0x1a8] sm:$0xff] %vm2998, %v2987
      %3053 = vst.msk [vmem:[%s302 + $0x1b0] sm:$0xff] %vm2998, %v2988
      %3054 = vst.msk [vmem:[%s302 + $0x1b8] sm:$0xff] %vm2998, %v2989
      %3055 = vst.msk [vmem:[%s302 + $0x1c0] sm:$0xff] %vm2998, %v2990
      %3056 = vst.msk [vmem:[%s302 + $0x1c8] sm:$0xff] %vm2998, %v2991
      %3057 = vst.msk [vmem:[%s302 + $0x1d0] sm:$0xff] %vm2998, %v2992
      %3058 = vst.msk [vmem:[%s302 + $0x1d8] sm:$0xff] %vm2998, %v2993
      %3059 = vst.msk [vmem:[%s302 + $0x1e0] sm:$0xff] %vm2998, %v2994
      %3060 = vst.msk [vmem:[%s302 + $0x1e8] sm:$0xff] %vm2998, %v2995
      %3061 = vst.msk [vmem:[%s302 + $0x1f0] sm:$0xff] %vm2998, %v2996
      %3062 = vst.msk [vmem:[%s302 + $0x1f8] sm:$0xff] %vm2998, %v2997
      %s3063 = smul.u32 64, %s18
      %p3064 = scmp.lt.s32.totalorder %s3063, 191
      %s3065 = scalar_select %p3064, %s3063, 191
      %s3066 = smul.addr %s3065, 8
      %s3067 = scalar_lea.vmem %s7, %s3066
      // Predicated region
      $region49: #{tpu_custom_call.1} parent=47 // pred_check
        %p3068 = pneg %p193
      $region50: #{tpu_custom_call.1} parent=47 // pred_check_branch
        %3070 = sbr.rel (%p3068) target = $region52
      $region51: #{tpu_custom_call.1} parent=47 // pred_region
        %s3071 = smul.u32 64, %s18
      $region52: #{tpu_custom_call.1} parent=47 // pred_fallthru
        _
    $region48: #{tpu_custom_call.1} parent=5 // pred_fallthru
      _
    %p3072 = scmp.le.s32.totalorder 2, %s13
    // Predicated region
    $region53: #{tpu_custom_call.1} parent=5 // pred_check
      %p3073 = pneg %p3072
    $region54: #{tpu_custom_call.1} parent=5 // pred_check_branch
      %3075 = sbr.rel (%p3073) target = $region56
    $region55: #{tpu_custom_call.1} parent=5 // pred_region
      %s3076 = ssub.s32 %s13, 2
      // Predicated region
      $region57: #{tpu_custom_call.1} parent=55 // pred_check
        %p3077 = pneg %p199
      $region58: #{tpu_custom_call.1} parent=55 // pred_check_branch
        %3079 = sbr.rel (%p3077) target = $region60
      $region59: #{tpu_custom_call.1} parent=55 // pred_region
        %s3080 = smul.u32 64, %s19
        %p3081 = scmp.lt.s32.totalorder %s3080, 191
        %s3082 = scalar_select %p3081, %s3080, 191
        %s3083 = smul.addr %s3082, 8
        %s3084 = scalar_lea.vmem %s7, %s3083
      $region60: #{tpu_custom_call.1} parent=55 // pred_fallthru
        _
    $region56: #{tpu_custom_call.1} parent=5 // pred_fallthru
      _
  $region6: #{tpu_custom_call.1} parent=0 // loop_footer
    %s17 = sadd.s32 1, %s13
  $region7: #{tpu_custom_call.1} parent=0 // loop_footer_branch
    %12 = sbr.rel target = $region3
  $region8: #{tpu_custom_call.1} parent=0 // loop_exit
    _

</llo_original>
